<compile_context>
chip_gen: v7x
topology: tpu7x:2x2x1
jax: 0.10.0
libtpu: 0.0.40
codegen_flags: <defaults>
</compile_context>

<pallas_src>
import functools

import jax
import jax.numpy as jnp
from jax import lax
from jax.experimental import pallas as pl
from jax.experimental.pallas import tpu as pltpu


def _round_up(a, m):
    return (a + m - 1) // m * m


def _vmem_cap_bytes():
    # v5e/v6e: 128 MiB VMEM per TensorCore, v7x: 64 MiB.  Derive the request cap
    # from the hardware and leave headroom for Mosaic-internal scratch.
    raw = 64 << 20                      # conservative fallback if the query fails
    try:
        raw = int(pltpu.get_tpu_info().vmem_capacity_bytes)
    except Exception:
        pass
    return min(96 << 20, max(raw - (12 << 20), 16 << 20))


def _vmem_limit_bytes(tile_bytes, resident_bytes, scratch_bytes):
    # 2x for double-buffered pipelined tiles / resident inputs, plus margin.
    need = 2 * tile_bytes + 2 * resident_bytes + scratch_bytes
    return int(min(_vmem_cap_bytes(), max(need + (8 << 20), 24 << 20)))


# ---------------------------------------------------------------------------
# Phase 1: r = relu(conv2(conv1(x)) + bias), staged bypass rows,
#          per-tile partial BatchNorm statistics.
# ---------------------------------------------------------------------------
def _tdnnf_phase1_kernel(x_hbm, w1_ref, w2_ref, bias_ref,        # inputs
                         r_ref, byp_ref, stats_ref,              # outputs
                         x_buf, sem,                             # scratch
                         *, K, TM, U, U_pad, batch_rows, halo, byp_off):
    n = pl.program_id(0)          # batch element
    j = pl.program_id(1)          # row (output-time) tile within the batch element
    slot = j % 2

    def copy_desc(jj, sl):
        # Halo window of input rows covering output rows [jj*TM, jj*TM + TM) and
        # the K-1 extra taps.  Source advances TM rows per tile; x read ~once.
        row0 = n * batch_rows + jj * TM
        return pltpu.make_async_copy(
            x_hbm.at[pl.ds(row0, halo), :], x_buf.at[sl], sem.at[sl])

    # Manual double buffering: prime at j==0, prefetch j+1 while computing j.
    # TODO(synk): cross-batch prefetch of (n+1, 0) is deliberately skipped: with
    # the batch axis marked "parallel" (v7x megacore sharding) it could leave an
    # in-flight DMA at a core-shard boundary.
    @pl.when(j == 0)
    def _():
        copy_desc(j, slot).start()

    copy_desc(j, slot).wait()

    @pl.when(j + 1 < pl.num_programs(1))
    def _():
        copy_desc(j + 1, 1 - slot).start()

    xb = x_buf.at[slot]                       # (halo, Cp) view, compute dtype

    # First conv as K accumulated MXU matmuls on shifted slabs (value-chained so
    # Mosaic can keep the accumulation on the MXU result path).
    acc = jnp.dot(xb[0:TM, :], w1_ref[0], preferred_element_type=jnp.float32)
    for k in range(1, K):
        acc = acc + jnp.dot(xb[k:k + TM, :], w1_ref[k],
                            preferred_element_type=jnp.float32)

    z = jnp.dot(acc.astype(w2_ref.dtype), w2_ref[...],
                preferred_element_type=jnp.float32) + bias_ref[...]
    r = jnp.maximum(z, 0.0)                   # (TM, Dp) f32
    r_ref[...] = r.astype(r_ref.dtype)        # store in compute dtype (bf16/f32)

    # Bypass rows are already VMEM-resident in the halo window: stage them for
    # phase 2 (removes the host-side f32 bypass build and a full HBM pass).
    byp_ref[...] = xb[byp_off:byp_off + TM, :].astype(byp_ref.dtype)

    # Partial BatchNorm statistics from the pre-cast f32 value (single sweep:
    # sum and sum of squares).  Mask padded time rows so they don't pollute them.
    if U_pad != U:
        u_loc = lax.broadcasted_iota(jnp.int32, (TM, 1), 0)
        r = jnp.where(j * TM + u_loc < U, r, 0.0)
    ts = jnp.sum(r, axis=0, keepdims=True)            # (1, Dp)
    tq = jnp.sum(r * r, axis=0, keepdims=True)        # (1, Dp)
    row = lax.broadcasted_iota(jnp.int32, (8, r.shape[1]), 0)
    stats_ref[...] = jnp.where(row == 0, ts, jnp.where(row == 1, tq, 0.0))


# ---------------------------------------------------------------------------
# Phase 2: out = bypass_scale * byp + r * scale + shift   (f32 math)
# ---------------------------------------------------------------------------
def _tdnnf_phase2_kernel(r_ref, byp_ref, scale_ref, shift_ref, out_ref,
                         *, bypass_scale):
    r = r_ref[...].astype(jnp.float32)
    byp = byp_ref[...].astype(jnp.float32)
    out_ref[...] = bypass_scale * byp + r * scale_ref[...] + shift_ref[...]


# ---------------------------------------------------------------------------
# Wrapper
# ---------------------------------------------------------------------------
@functools.partial(
    jax.jit,
    static_argnames=("kernel_size", "subsampling_factor", "bypass_scale", "eps",
                     "compute_dtype", "tile_rows", "channels_last_in",
                     "channels_last_out"))
def factorized_tdnn_forward(x, w1, w2, b2, *, kernel_size, subsampling_factor,
                            bypass_scale=0.66, eps=1e-5,
                            compute_dtype=jnp.bfloat16, tile_rows=512,
                            channels_last_in=False, channels_last_out=False):
    """x: (N, dim, T) f32, or (N, T, dim) if channels_last_in.
    w1: (bottleneck, dim, K).  w2: (dim, bottleneck, 1).  b2: (dim,)."""
    # TODO(synk): SharedDimScaleDropout with alpha > 0 needs in-kernel PRNG
    # (pltpu.prng_seed / stateful_uniform); the default alpha=0.0 is identity.
    # BatchNorm running-stat (momentum) updates are training bookkeeping only.
    K = int(kernel_size)
    s = int(subsampling_factor)
    B = w1.shape[0]
    D = w2.shape[0]

    if channels_last_in:
        N, T, C = x.shape
        x_ntc = x.astype(jnp.float32)
    else:
        N, C, T = x.shape
        x_ntc = jnp.transpose(x, (0, 2, 1)).astype(jnp.float32)
    assert C == D
    # The module's bypass slice only shape-matches for K == 1 or (s == 1, K == 3).
    assert K == 1 or (s == 1 and K == 3), \
        "FactorizedTDNN bypass requires kernel_size == 1 or (s == 1, kernel_size == 3)"

    t_lin = T - K + 1
    U = (t_lin - 1) // s + 1                     # output time length
    byp_off = 0 if K == 1 else s                 # bypass row offset inside the halo

    # Padded / tiled geometry.  Sublane quantum depends on the compute dtype.
    cb = jnp.dtype(compute_dtype).itemsize
    sub = {4: 8, 2: 16, 1: 32}.get(cb, 8)
    Cp = _round_up(C, 128)
    Dp = Cp
    Bp = _round_up(B, 128)
    TM = min(_round_up(tile_rows, sub), _round_up(U, sub))
    U_pad = _round_up(U, TM)
    JT = U_pad // TM
    pad_k = _round_up(K - 1, sub) if K > 1 else 0
    halo = TM + pad_k                              # rows DMA'd per tile
    batch_rows = U_pad + pad_k                     # rows of x_lin per batch element
    R_pad = N * U_pad

    # Linearize x so that (output time u, tap k) reads x_lin[n, u + k, :]:
    #   s == 1 : x_lin is just x (time padded);  K == 1 : stride baked in on host.
    # Single fused cast + pad (no zeros/.at[].set passes).
    x_sel = x_ntc if s == 1 else x_ntc[:, ::s, :]
    x_lin = jnp.pad(x_sel.astype(compute_dtype),
                    ((0, 0), (0, batch_rows - x_sel.shape[1]), (0, Cp - C)))
    x_lin = x_lin.reshape(N * batch_rows, Cp)

    # Weights / bias, padded to lane-dense shapes, compute dtype for the MXU.
    w1_m = jnp.zeros((K, Cp, Bp), compute_dtype)
    w1_m = w1_m.at[:, :C, :B].set(jnp.transpose(w1, (2, 1, 0)).astype(compute_dtype))
    w2_m = jnp.zeros((Bp, Dp), compute_dtype)
    w2_m = w2_m.at[:B, :D].set(jnp.transpose(w2[:, :, 0], (1, 0)).astype(compute_dtype))
    bias = jnp.zeros((1, Dp), jnp.float32).at[0, :D].set(b2.astype(jnp.float32))

    # ------------------------- phase 1 -------------------------
    vmem1 = _vmem_limit_bytes(
        tile_bytes=2 * TM * Dp * cb + 8 * Dp * 4,
        resident_bytes=K * Cp * Bp * cb + Bp * Dp * cb + Dp * 4,
        scratch_bytes=2 * halo * Cp * cb)
    kern1 = functools.partial(
        _tdnnf_phase1_kernel, K=K, TM=TM, U=U, U_pad=U_pad,
        batch_rows=batch_rows, halo=halo, byp_off=byp_off)
    r, byp, stats = pl.pallas_call(
        kern1,
        out_shape=(jax.ShapeDtypeStruct((R_pad, Dp), compute_dtype),
                   jax.ShapeDtypeStruct((R_pad, Dp), compute_dtype),
                   jax.ShapeDtypeStruct((N * JT * 8, Dp), jnp.float32)),
        grid_spec=pltpu.PrefetchScalarGridSpec(
            num_scalar_prefetch=0,
            grid=(N, JT),
            in_specs=[
                pl.BlockSpec(memory_space=pl.ANY),                    # x (raw HBM)
                pl.BlockSpec((K, Cp, Bp), lambda n, j: (0, 0, 0)),    # w1 (resident)
                pl.BlockSpec((Bp, Dp), lambda n, j: (0, 0)),          # w2 (resident)
                pl.BlockSpec((1, Dp), lambda n, j: (0, 0)),           # bias (resident)
            ],
            out_specs=(
                pl.BlockSpec((TM, Dp), lambda n, j: (n * JT + j, 0)),  # r
                pl.BlockSpec((TM, Dp), lambda n, j: (n * JT + j, 0)),  # bypass rows
                pl.BlockSpec((8, Dp), lambda n, j: (n * JT + j, 0)),   # partial stats
            ),
            scratch_shapes=[
                pltpu.VMEM((2, halo, Cp), compute_dtype),   # x halo double buffer
                pltpu.SemaphoreType.DMA((2,)),
            ]),
        compiler_params=pltpu.CompilerParams(
            dimension_semantics=("parallel", "arbitrary"),
            vmem_limit_bytes=vmem1),
    )(x_lin, w1_m, w2_m, bias)

    # Finalize global BatchNorm statistics (tiny (Dp,) reduction on the host graph).
    st = stats.reshape(N * JT, 8, Dp)
    cnt = jnp.float32(N * U)
    mean = st[:, 0, :].sum(axis=0) / cnt
    ex2 = st[:, 1, :].sum(axis=0) / cnt
    var = jnp.maximum(ex2 - mean * mean, 0.0)         # biased variance
    inv = lax.rsqrt(var + jnp.float32(eps))
    scale = inv.reshape(1, Dp)
    shift = (-mean * inv).reshape(1, Dp)

    # ------------------------- phase 2 -------------------------
    # Streaming axpy over flat (R_pad, Dp) arrays; row block decoupled from TM,
    # targeting ~1024 rows per grid step to amortize per-step overhead.
    total_blocks = N * JT
    k_lim = max(1, min(total_blocks, 1024 // TM))
    kk = 1
    for cand in range(k_lim, 0, -1):
        if total_blocks % cand == 0:
            kk = cand
            break
    TM2 = TM * kk
    G2 = total_blocks // kk

    vmem2 = _vmem_limit_bytes(tile_bytes=TM2 * Dp * (2 * cb + 4),
                              resident_bytes=2 * Dp * 4, scratch_bytes=0)
    out = pl.pallas_call(
        functools.partial(_tdnnf_phase2_kernel, bypass_scale=float(bypass_scale)),
        out_shape=jax.ShapeDtypeStruct((R_pad, Dp), jnp.float32),
        grid_spec=pltpu.PrefetchScalarGridSpec(
            num_scalar_prefetch=0,
            grid=(G2,),
            in_specs=[
                pl.BlockSpec((TM2, Dp), lambda i: (i, 0)),    # r
                pl.BlockSpec((TM2, Dp), lambda i: (i, 0)),    # bypass rows
                pl.BlockSpec((1, Dp), lambda i: (0, 0)),      # scale (resident)
                pl.BlockSpec((1, Dp), lambda i: (0, 0)),      # shift (resident)
            ],
            out_specs=pl.BlockSpec((TM2, Dp), lambda i: (i, 0))),
        compiler_params=pltpu.CompilerParams(
            dimension_semantics=("parallel",),
            vmem_limit_bytes=vmem2),
    )(r, byp, scale, shift)

    out = out.reshape(N, U_pad, Dp)[:, :U, :D]        # drop time/channel padding
    if channels_last_out:
        return out                                    # (N, U, dim) — no transpose
    return jnp.transpose(out, (0, 2, 1))              # (N, dim, U), module layout


# ---------------------------------------------------------------------------
# Pure-JAX reference mirroring the PyTorch module (NCT layout, f32).
# ---------------------------------------------------------------------------
def _reference_forward(x_nct, w1, w2, b2, *, kernel_size, subsampling_factor,
                       bypass_scale=0.66, eps=1e-5):
    K = kernel_size
    s = subsampling_factor
    y = lax.conv_general_dilated(x_nct, w1, window_strides=(1,), padding='VALID',
                                 dimension_numbers=('NCH', 'OIH', 'NCH'))
    z = lax.conv_general_dilated(y, w2, window_strides=(s,), padding='VALID',
                                 dimension_numbers=('NCH', 'OIH', 'NCH'))
    z = z + b2[None, :, None]
    r = jnp.maximum(z, 0.0)
    mean = jnp.mean(r, axis=(0, 2), keepdims=True)
    var = jnp.mean(jnp.square(r - mean), axis=(0, 2), keepdims=True)
    xn = (r - mean) / jnp.sqrt(var + eps)
    byp = x_nct[:, :, s:-s:s] if K > 1 else x_nct[:, :, ::s]
    return bypass_scale * byp + xn


if __name__ == "__main__":
    def _check(N, DIM, T, B, K, S, dtype, tol, tile_rows):
        key = jax.random.PRNGKey(0)
        kx, k1, k2, kb = jax.random.split(key, 4)
        x = jax.random.normal(kx, (N, DIM, T), dtype=jnp.float32)
        w1 = 0.1 * jax.random.normal(k1, (B, DIM, K), dtype=jnp.float32)
        w2 = 0.1 * jax.random.normal(k2, (DIM, B, 1), dtype=jnp.float32)
        b2 = 0.1 * jax.random.normal(kb, (DIM,), dtype=jnp.float32)

        out = factorized_tdnn_forward(
            x, w1, w2, b2, kernel_size=K, subsampling_factor=S,
            compute_dtype=dtype, tile_rows=tile_rows)
        out = jax.block_until_ready(out)
        ref = jax.block_until_ready(_reference_forward(
            x, w1, w2, b2, kernel_size=K, subsampling_factor=S))
        assert out.shape == ref.shape, (out.shape, ref.shape)
        err = float(jnp.max(jnp.abs(out - ref)))
        assert err < tol, (K, S, str(dtype), err)

    # Multi-tile row grid (JT > 1): halo DMA double-buffer chain, per-tile BN
    # partials, padded-row masking, and the staged in-kernel bypass copy.
    _check(2, 32, 67, 8, 3, 1, jnp.float32, 2e-3, tile_rows=16)
    # Same config with bf16 MXU operands + bf16 r / bypass staging.
    _check(2, 32, 67, 8, 3, 1, jnp.bfloat16, 1.5e-1, tile_rows=16)
    # K == 1 with subsampling_factor 3 (stride baked into the host linearization).
    _check(2, 32, 16, 8, 1, 3, jnp.float32, 2e-3, tile_rows=256)

    print("KERNEL_OK")
</pallas_src>

<mosaic_0001>
module attributes {stable_mosaic.version = 11 : i64} {
  func.func @_tdnnf_phase1_kernel(%arg0: i32, %arg1: i32, %arg2: memref<176x128xf32, #tpu.memory_space<any>>, %arg3: memref<3x128x128xf32, #tpu.memory_space<vmem>>, %arg4: memref<128x128xf32, #tpu.memory_space<vmem>>, %arg5: memref<1x128xf32, #tpu.memory_space<vmem>>, %arg6: memref<16x128xf32, #tpu.memory_space<vmem>>, %arg7: memref<16x128xf32, #tpu.memory_space<vmem>>, %arg8: memref<8x128xf32, #tpu.memory_space<vmem>>, %arg9: memref<2x24x128xf32, #tpu.memory_space<vmem>>, %arg10: memref<2x!tpu.dma_semaphore, #tpu.memory_space<semaphore_mem>>) attributes {dimension_semantics = [#tpu.dimension_semantics<parallel>, #tpu.dimension_semantics<arbitrary>], iteration_bounds = array<i64: 2, 5>, scalar_prefetch = 0 : i64, scratch_operands = 2 : i64, tpu.core_type = #tpu.core_type<tc>, window_params = [{}, {pipeline_mode = #tpu.pipeline_mode<synchronous>, transform_indices = @transform_1, window_bounds = array<i64: 3, 128, 128>}, {pipeline_mode = #tpu.pipeline_mode<synchronous>, transform_indices = @transform_2, window_bounds = array<i64: 128, 128>}, {pipeline_mode = #tpu.pipeline_mode<synchronous>, transform_indices = @transform_3, window_bounds = array<i64: 1, 128>}, {transform_indices = @transform_4, window_bounds = array<i64: 16, 128>}, {transform_indices = @transform_5, window_bounds = array<i64: 16, 128>}, {transform_indices = @transform_6, window_bounds = array<i64: 8, 128>}]} {
    %c2_i32 = arith.constant 2 : i32
    %c0_i32 = arith.constant 0 : i32
    %0 = arith.cmpi eq, %c2_i32, %c0_i32 : i32
    %c1_i32 = arith.constant 1 : i32
    %1 = arith.select %0, %c1_i32, %c2_i32 : i32
    %2 = arith.remsi %arg1, %1 : i32
    %c0_i32_0 = arith.constant 0 : i32
    %3 = arith.cmpi ne, %2, %c0_i32_0 : i32
    %c0_i32_1 = arith.constant 0 : i32
    %4 = arith.cmpi slt, %2, %c0_i32_1 : i32
    %c0_i32_2 = arith.constant 0 : i32
    %5 = arith.cmpi slt, %1, %c0_i32_2 : i32
    %6 = arith.xori %4, %5 : i1
    %7 = arith.andi %6, %3 : i1
    %8 = arith.addi %2, %1 : i32
    %9 = arith.select %7, %8, %2 : i32
    %c0_i32_3 = arith.constant 0 : i32
    %10 = arith.cmpi eq, %arg1, %c0_i32_3 : i32
    %11 = arith.extui %10 : i1 to i32
    %c0_i32_4 = arith.constant 0 : i32
    %12 = arith.cmpi ne, %11, %c0_i32_4 : i32
    scf.if %12 {
      %c88_i32_53 = arith.constant 88 : i32
      %85 = arith.muli %arg0, %c88_i32_53 : i32
      %c16_i32_54 = arith.constant 16 : i32
      %86 = arith.muli %arg1, %c16_i32_54 : i32
      %87 = arith.addi %85, %86 : i32
      %c0_i32_55 = arith.constant 0 : i32
      %88 = tpu.memref_slice %arg2[%87, %c0_i32_55] : memref<176x128xf32, #tpu.memory_space<any>> -> memref<24x128xf32, #tpu.memory_space<any>>
      %c0_i32_56 = arith.constant 0 : i32
      %c0_i32_57 = arith.constant 0 : i32
      %89 = tpu.memref_slice %arg9[%9, %c0_i32_56, %c0_i32_57] : memref<2x24x128xf32, #tpu.memory_space<vmem>> -> memref<1x24x128xf32, #tpu.memory_space<vmem>>
      %90 = tpu.memref_squeeze %89 : memref<1x24x128xf32, #tpu.memory_space<vmem>> -> memref<24x128xf32, #tpu.memory_space<vmem>>
      %91 = tpu.memref_slice %arg10[%9] : memref<2x!tpu.dma_semaphore, #tpu.memory_space<semaphore_mem>> -> memref<1x!tpu.dma_semaphore, #tpu.memory_space<semaphore_mem>>
      %92 = tpu.memref_squeeze %91 : memref<1x!tpu.dma_semaphore, #tpu.memory_space<semaphore_mem>> -> memref<!tpu.dma_semaphore, #tpu.memory_space<semaphore_mem>>
      tpu.enqueue_dma source(%88 : memref<24x128xf32, #tpu.memory_space<any>>) target(%90 : memref<24x128xf32, #tpu.memory_space<vmem>>) target_semaphore(%92 : memref<!tpu.dma_semaphore, #tpu.memory_space<semaphore_mem>>)
    } else {
    }
    %c88_i32 = arith.constant 88 : i32
    %13 = arith.muli %arg0, %c88_i32 : i32
    %c16_i32 = arith.constant 16 : i32
    %14 = arith.muli %arg1, %c16_i32 : i32
    %15 = arith.addi %13, %14 : i32
    %c0_i32_5 = arith.constant 0 : i32
    %16 = tpu.memref_slice %arg2[%15, %c0_i32_5] : memref<176x128xf32, #tpu.memory_space<any>> -> memref<24x128xf32, #tpu.memory_space<any>>
    %c0_i32_6 = arith.constant 0 : i32
    %c0_i32_7 = arith.constant 0 : i32
    %17 = tpu.memref_slice %arg9[%9, %c0_i32_6, %c0_i32_7] : memref<2x24x128xf32, #tpu.memory_space<vmem>> -> memref<1x24x128xf32, #tpu.memory_space<vmem>>
    %18 = tpu.memref_squeeze %17 : memref<1x24x128xf32, #tpu.memory_space<vmem>> -> memref<24x128xf32, #tpu.memory_space<vmem>>
    %19 = tpu.memref_slice %arg10[%9] : memref<2x!tpu.dma_semaphore, #tpu.memory_space<semaphore_mem>> -> memref<1x!tpu.dma_semaphore, #tpu.memory_space<semaphore_mem>>
    %20 = tpu.memref_squeeze %19 : memref<1x!tpu.dma_semaphore, #tpu.memory_space<semaphore_mem>> -> memref<!tpu.dma_semaphore, #tpu.memory_space<semaphore_mem>>
    tpu.wait_dma2 semaphore(%20 : memref<!tpu.dma_semaphore, #tpu.memory_space<semaphore_mem>>) src(%16 : memref<24x128xf32, #tpu.memory_space<any>>) dst(%18 : memref<24x128xf32, #tpu.memory_space<vmem>>)
    %c1_i32_8 = arith.constant 1 : i32
    %21 = arith.addi %arg1, %c1_i32_8 : i32
    %c5_i32 = arith.constant 5 : i32
    %22 = arith.cmpi slt, %21, %c5_i32 : i32
    %23 = arith.extui %22 : i1 to i32
    %c0_i32_9 = arith.constant 0 : i32
    %24 = arith.cmpi ne, %23, %c0_i32_9 : i32
    scf.if %24 {
      %c1_i32_53 = arith.constant 1 : i32
      %85 = arith.addi %arg1, %c1_i32_53 : i32
      %c1_i32_54 = arith.constant 1 : i32
      %86 = arith.subi %c1_i32_54, %9 : i32
      %c88_i32_55 = arith.constant 88 : i32
      %87 = arith.muli %arg0, %c88_i32_55 : i32
      %c16_i32_56 = arith.constant 16 : i32
      %88 = arith.muli %85, %c16_i32_56 : i32
      %89 = arith.addi %87, %88 : i32
      %c0_i32_57 = arith.constant 0 : i32
      %90 = tpu.memref_slice %arg2[%89, %c0_i32_57] : memref<176x128xf32, #tpu.memory_space<any>> -> memref<24x128xf32, #tpu.memory_space<any>>
      %c0_i32_58 = arith.constant 0 : i32
      %c0_i32_59 = arith.constant 0 : i32
      %91 = tpu.memref_slice %arg9[%86, %c0_i32_58, %c0_i32_59] : memref<2x24x128xf32, #tpu.memory_space<vmem>> -> memref<1x24x128xf32, #tpu.memory_space<vmem>>
      %92 = tpu.memref_squeeze %91 : memref<1x24x128xf32, #tpu.memory_space<vmem>> -> memref<24x128xf32, #tpu.memory_space<vmem>>
      %93 = tpu.memref_slice %arg10[%86] : memref<2x!tpu.dma_semaphore, #tpu.memory_space<semaphore_mem>> -> memref<1x!tpu.dma_semaphore, #tpu.memory_space<semaphore_mem>>
      %94 = tpu.memref_squeeze %93 : memref<1x!tpu.dma_semaphore, #tpu.memory_space<semaphore_mem>> -> memref<!tpu.dma_semaphore, #tpu.memory_space<semaphore_mem>>
      tpu.enqueue_dma source(%90 : memref<24x128xf32, #tpu.memory_space<any>>) target(%92 : memref<24x128xf32, #tpu.memory_space<vmem>>) target_semaphore(%94 : memref<!tpu.dma_semaphore, #tpu.memory_space<semaphore_mem>>)
    } else {
    }
    %c0_i32_10 = arith.constant 0 : i32
    %c0_i32_11 = arith.constant 0 : i32
    %25 = tpu.memref_slice %arg9[%9, %c0_i32_10, %c0_i32_11] : memref<2x24x128xf32, #tpu.memory_space<vmem>> -> memref<1x24x128xf32, #tpu.memory_space<vmem>>
    %26 = tpu.memref_squeeze %25 : memref<1x24x128xf32, #tpu.memory_space<vmem>> -> memref<24x128xf32, #tpu.memory_space<vmem>>
    %c0 = arith.constant 0 : index
    %c0_12 = arith.constant 0 : index
    %27 = vector.load %26[%c0, %c0_12] : memref<24x128xf32, #tpu.memory_space<vmem>>, vector<16x128xf32>
    %c0_13 = arith.constant 0 : index
    %c0_14 = arith.constant 0 : index
    %c0_15 = arith.constant 0 : index
    %28 = vector.load %arg3[%c0_13, %c0_14, %c0_15] : memref<3x128x128xf32, #tpu.memory_space<vmem>>, vector<1x128x128xf32>
    %29 = vector.shape_cast %28 : vector<1x128x128xf32> to vector<128x128xf32>
    %cst = arith.constant dense<0.000000e+00> : vector<16x128xf32>
    %30 = tpu.matmul %27, %29, %cst {dimension_numbers = #tpu.dot_dimension_numbers<[1], [0], [0], [1], [0, 0, 1, 1], [], []>} : vector<16x128xf32>, vector<128x128xf32>, vector<16x128xf32> -> vector<16x128xf32>
    %c0_i32_16 = arith.constant 0 : i32
    %c0_i32_17 = arith.constant 0 : i32
    %31 = tpu.memref_slice %arg9[%9, %c0_i32_16, %c0_i32_17] : memref<2x24x128xf32, #tpu.memory_space<vmem>> -> memref<1x24x128xf32, #tpu.memory_space<vmem>>
    %32 = tpu.memref_squeeze %31 : memref<1x24x128xf32, #tpu.memory_space<vmem>> -> memref<24x128xf32, #tpu.memory_space<vmem>>
    %c1 = arith.constant 1 : index
    %c0_18 = arith.constant 0 : index
    %33 = vector.load %32[%c1, %c0_18] : memref<24x128xf32, #tpu.memory_space<vmem>>, vector<16x128xf32>
    %c1_19 = arith.constant 1 : index
    %c0_20 = arith.constant 0 : index
    %c0_21 = arith.constant 0 : index
    %34 = vector.load %arg3[%c1_19, %c0_20, %c0_21] : memref<3x128x128xf32, #tpu.memory_space<vmem>>, vector<1x128x128xf32>
    %35 = vector.shape_cast %34 : vector<1x128x128xf32> to vector<128x128xf32>
    %cst_22 = arith.constant dense<0.000000e+00> : vector<16x128xf32>
    %36 = tpu.matmul %33, %35, %cst_22 {dimension_numbers = #tpu.dot_dimension_numbers<[1], [0], [0], [1], [0, 0, 1, 1], [], []>} : vector<16x128xf32>, vector<128x128xf32>, vector<16x128xf32> -> vector<16x128xf32>
    %37 = arith.addf %30, %36 : vector<16x128xf32>
    %c0_i32_23 = arith.constant 0 : i32
    %c0_i32_24 = arith.constant 0 : i32
    %38 = tpu.memref_slice %arg9[%9, %c0_i32_23, %c0_i32_24] : memref<2x24x128xf32, #tpu.memory_space<vmem>> -> memref<1x24x128xf32, #tpu.memory_space<vmem>>
    %39 = tpu.memref_squeeze %38 : memref<1x24x128xf32, #tpu.memory_space<vmem>> -> memref<24x128xf32, #tpu.memory_space<vmem>>
    %c2 = arith.constant 2 : index
    %c0_25 = arith.constant 0 : index
    %40 = vector.load %39[%c2, %c0_25] : memref<24x128xf32, #tpu.memory_space<vmem>>, vector<16x128xf32>
    %c2_26 = arith.constant 2 : index
    %c0_27 = arith.constant 0 : index
    %c0_28 = arith.constant 0 : index
    %41 = vector.load %arg3[%c2_26, %c0_27, %c0_28] : memref<3x128x128xf32, #tpu.memory_space<vmem>>, vector<1x128x128xf32>
    %42 = vector.shape_cast %41 : vector<1x128x128xf32> to vector<128x128xf32>
    %cst_29 = arith.constant dense<0.000000e+00> : vector<16x128xf32>
    %43 = tpu.matmul %40, %42, %cst_29 {dimension_numbers = #tpu.dot_dimension_numbers<[1], [0], [0], [1], [0, 0, 1, 1], [], []>} : vector<16x128xf32>, vector<128x128xf32>, vector<16x128xf32> -> vector<16x128xf32>
    %44 = arith.addf %37, %43 : vector<16x128xf32>
    %c0_30 = arith.constant 0 : index
    %c0_31 = arith.constant 0 : index
    %45 = vector.load %arg4[%c0_30, %c0_31] : memref<128x128xf32, #tpu.memory_space<vmem>>, vector<128x128xf32>
    %cst_32 = arith.constant dense<0.000000e+00> : vector<16x128xf32>
    %46 = tpu.matmul %44, %45, %cst_32 {dimension_numbers = #tpu.dot_dimension_numbers<[1], [0], [0], [1], [0, 0, 1, 1], [], []>} : vector<16x128xf32>, vector<128x128xf32>, vector<16x128xf32> -> vector<16x128xf32>
    %c0_33 = arith.constant 0 : index
    %c0_34 = arith.constant 0 : index
    %47 = vector.load %arg5[%c0_33, %c0_34] : memref<1x128xf32, #tpu.memory_space<vmem>>, vector<1x128xf32>
    %48 = vector.broadcast %47 : vector<1x128xf32> to vector<16x128xf32>
    %49 = arith.addf %46, %48 : vector<16x128xf32>
    %cst_35 = arith.constant 0.000000e+00 : f32
    %50 = vector.broadcast %cst_35 : f32 to vector<16x128xf32>
    %51 = arith.maximumf %49, %50 : vector<16x128xf32>
    %c0_36 = arith.constant 0 : index
    %c0_37 = arith.constant 0 : index
    %52 = vector.load %arg6[%c0_36, %c0_37] : memref<16x128xf32, #tpu.memory_space<vmem>>, vector<16x128xf32>
    tpu.vector_store %arg6[%c0_36, %c0_37], %51 {strides = array<i32>} : memref<16x128xf32, #tpu.memory_space<vmem>>, vector<16x128xf32>,
    %c0_i32_38 = arith.constant 0 : i32
    %c0_i32_39 = arith.constant 0 : i32
    %53 = tpu.memref_slice %arg9[%9, %c0_i32_38, %c0_i32_39] : memref<2x24x128xf32, #tpu.memory_space<vmem>> -> memref<1x24x128xf32, #tpu.memory_space<vmem>>
    %54 = tpu.memref_squeeze %53 : memref<1x24x128xf32, #tpu.memory_space<vmem>> -> memref<24x128xf32, #tpu.memory_space<vmem>>
    %c1_40 = arith.constant 1 : index
    %c0_41 = arith.constant 0 : index
    %55 = vector.load %54[%c1_40, %c0_41] : memref<24x128xf32, #tpu.memory_space<vmem>>, vector<16x128xf32>
    %c0_42 = arith.constant 0 : index
    %c0_43 = arith.constant 0 : index
    %56 = vector.load %arg7[%c0_42, %c0_43] : memref<16x128xf32, #tpu.memory_space<vmem>>, vector<16x128xf32>
    tpu.vector_store %arg7[%c0_42, %c0_43], %55 {strides = array<i32>} : memref<16x128xf32, #tpu.memory_space<vmem>>, vector<16x128xf32>,
    %57 = tpu.iota {dimensions = array<i32: 0>} : vector<16x1xi32>
    %c16_i32_44 = arith.constant 16 : i32
    %58 = arith.muli %arg1, %c16_i32_44 : i32
    %59 = vector.broadcast %58 : i32 to vector<16x1xi32>
    %60 = arith.addi %59, %57 : vector<16x1xi32>
    %c65_i32 = arith.constant 65 : i32
    %61 = vector.broadcast %c65_i32 : i32 to vector<16x1xi32>
    %62 = arith.cmpi slt, %60, %61 : vector<16x1xi32>
    %cst_45 = arith.constant 0.000000e+00 : f32
    %63 = vector.shape_cast %62 : vector<16x1xi1> to vector<16x1xi1>
    %64 = vector.broadcast %63 : vector<16x1xi1> to vector<16x128xi1>
    %65 = vector.broadcast %cst_45 : f32 to vector<16x128xf32>
    %66 = arith.select %64, %51, %65 : vector<16x128xi1>, vector<16x128xf32>
    %cst_46 = arith.constant dense<0.000000e+00> : vector<128xf32>
    %67 = vector.multi_reduction <add>, %66, %cst_46 [0] : vector<16x128xf32> to vector<128xf32>
    %68 = vector.shape_cast %67 : vector<128xf32> to vector<1x128xf32>
    %69 = arith.mulf %66, %66 : vector<16x128xf32>
    %cst_47 = arith.constant dense<0.000000e+00> : vector<128xf32>
    %70 = vector.multi_reduction <add>, %69, %cst_47 [0] : vector<16x128xf32> to vector<128xf32>
    %71 = vector.shape_cast %70 : vector<128xf32> to vector<1x128xf32>
    %72 = tpu.iota {dimensions = array<i32: 0>} : vector<8x128xi32>
    %c0_i32_48 = arith.constant 0 : i32
    %73 = vector.broadcast %c0_i32_48 : i32 to vector<8x128xi32>
    %74 = arith.cmpi eq, %72, %73 : vector<8x128xi32>
    %c1_i32_49 = arith.constant 1 : i32
    %75 = vector.broadcast %c1_i32_49 : i32 to vector<8x128xi32>
    %76 = arith.cmpi eq, %72, %75 : vector<8x128xi32>
    %cst_50 = arith.constant 0.000000e+00 : f32
    %77 = vector.shape_cast %71 : vector<1x128xf32> to vector<1x128xf32>
    %78 = vector.broadcast %77 : vector<1x128xf32> to vector<8x128xf32>
    %79 = vector.broadcast %cst_50 : f32 to vector<8x128xf32>
    %80 = arith.select %76, %78, %79 : vector<8x128xi1>, vector<8x128xf32>
    %81 = vector.shape_cast %68 : vector<1x128xf32> to vector<1x128xf32>
    %82 = vector.broadcast %81 : vector<1x128xf32> to vector<8x128xf32>
    %83 = arith.select %74, %82, %80 : vector<8x128xi1>, vector<8x128xf32>
    %c0_51 = arith.constant 0 : index
    %c0_52 = arith.constant 0 : index
    %84 = vector.load %arg8[%c0_51, %c0_52] : memref<8x128xf32, #tpu.memory_space<vmem>>, vector<8x128xf32>
    tpu.vector_store %arg8[%c0_51, %c0_52], %83 {strides = array<i32>} : memref<8x128xf32, #tpu.memory_space<vmem>>, vector<8x128xf32>,
    return
  }
  func.func @transform_1(%arg0: i32, %arg1: i32) -> (i32, i32, i32) {
    %c0_i32 = arith.constant 0 : i32
    %c0_i32_0 = arith.constant 0 : i32
    %c0_i32_1 = arith.constant 0 : i32
    %c0_i32_2 = arith.constant 0 : i32
    return %c0_i32, %c0_i32_0, %c0_i32_1 : i32, i32, i32
  }
  func.func @transform_2(%arg0: i32, %arg1: i32) -> (i32, i32) {
    %c0_i32 = arith.constant 0 : i32
    %c0_i32_0 = arith.constant 0 : i32
    %c0_i32_1 = arith.constant 0 : i32
    return %c0_i32, %c0_i32_0 : i32, i32
  }
  func.func @transform_3(%arg0: i32, %arg1: i32) -> (i32, i32) {
    %c0_i32 = arith.constant 0 : i32
    %c0_i32_0 = arith.constant 0 : i32
    %c0_i32_1 = arith.constant 0 : i32
    return %c0_i32, %c0_i32_0 : i32, i32
  }
  func.func @transform_4(%arg0: i32, %arg1: i32) -> (i32, i32) {
    %c5_i32 = arith.constant 5 : i32
    %0 = arith.muli %arg0, %c5_i32 : i32
    %1 = arith.addi %0, %arg1 : i32
    %c0_i32 = arith.constant 0 : i32
    %c0_i32_0 = arith.constant 0 : i32
    return %1, %c0_i32 : i32, i32
  }
  func.func @transform_5(%arg0: i32, %arg1: i32) -> (i32, i32) {
    %c5_i32 = arith.constant 5 : i32
    %0 = arith.muli %arg0, %c5_i32 : i32
    %1 = arith.addi %0, %arg1 : i32
    %c0_i32 = arith.constant 0 : i32
    %c0_i32_0 = arith.constant 0 : i32
    return %1, %c0_i32 : i32, i32
  }
  func.func @transform_6(%arg0: i32, %arg1: i32) -> (i32, i32) {
    %c5_i32 = arith.constant 5 : i32
    %0 = arith.muli %arg0, %c5_i32 : i32
    %1 = arith.addi %0, %arg1 : i32
    %c0_i32 = arith.constant 0 : i32
    %c0_i32_0 = arith.constant 0 : i32
    return %1, %c0_i32 : i32, i32
  }
}

module attributes {stable_mosaic.version = 11 : i64} {
  func.func @_tdnnf_phase2_kernel(%arg0: i32, %arg1: memref<160x128xf32, #tpu.memory_space<vmem>>, %arg2: memref<160x128xf32, #tpu.memory_space<vmem>>, %arg3: memref<1x128xf32, #tpu.memory_space<vmem>>, %arg4: memref<1x128xf32, #tpu.memory_space<vmem>>, %arg5: memref<160x128xf32, #tpu.memory_space<vmem>>) attributes {dimension_semantics = [#tpu.dimension_semantics<parallel>], iteration_bounds = array<i64: 1>, scalar_prefetch = 0 : i64, scratch_operands = 0 : i64, tpu.core_type = #tpu.core_type<tc>, window_params = [{transform_indices = @transform_0, window_bounds = array<i64: 160, 128>}, {transform_indices = @transform_1, window_bounds = array<i64: 160, 128>}, {pipeline_mode = #tpu.pipeline_mode<synchronous>, transform_indices = @transform_2, window_bounds = array<i64: 1, 128>}, {pipeline_mode = #tpu.pipeline_mode<synchronous>, transform_indices = @transform_3, window_bounds = array<i64: 1, 128>}, {transform_indices = @transform_4, window_bounds = array<i64: 160, 128>}]} {
    %c0 = arith.constant 0 : index
    %c0_0 = arith.constant 0 : index
    %0 = vector.load %arg1[%c0, %c0_0] : memref<160x128xf32, #tpu.memory_space<vmem>>, vector<160x128xf32>
    %c0_1 = arith.constant 0 : index
    %c0_2 = arith.constant 0 : index
    %1 = vector.load %arg2[%c0_1, %c0_2] : memref<160x128xf32, #tpu.memory_space<vmem>>, vector<160x128xf32>
    %cst = arith.constant 6.600000e-01 : f32
    %2 = vector.broadcast %cst : f32 to vector<160x128xf32>
    %3 = arith.mulf %2, %1 : vector<160x128xf32>
    %c0_3 = arith.constant 0 : index
    %c0_4 = arith.constant 0 : index
    %4 = vector.load %arg3[%c0_3, %c0_4] : memref<1x128xf32, #tpu.memory_space<vmem>>, vector<1x128xf32>
    %5 = vector.broadcast %4 : vector<1x128xf32> to vector<160x128xf32>
    %6 = arith.mulf %0, %5 : vector<160x128xf32>
    %7 = arith.addf %3, %6 : vector<160x128xf32>
    %c0_5 = arith.constant 0 : index
    %c0_6 = arith.constant 0 : index
    %8 = vector.load %arg4[%c0_5, %c0_6] : memref<1x128xf32, #tpu.memory_space<vmem>>, vector<1x128xf32>
    %9 = vector.broadcast %8 : vector<1x128xf32> to vector<160x128xf32>
    %10 = arith.addf %7, %9 : vector<160x128xf32>
    %c0_7 = arith.constant 0 : index
    %c0_8 = arith.constant 0 : index
    %11 = vector.load %arg5[%c0_7, %c0_8] : memref<160x128xf32, #tpu.memory_space<vmem>>, vector<160x128xf32>
    tpu.vector_store %arg5[%c0_7, %c0_8], %10 {strides = array<i32>} : memref<160x128xf32, #tpu.memory_space<vmem>>, vector<160x128xf32>,
    return
  }
  func.func @transform_0(%arg0: i32) -> (i32, i32) {
    %c0_i32 = arith.constant 0 : i32
    %c0_i32_0 = arith.constant 0 : i32
    return %arg0, %c0_i32 : i32, i32
  }
  func.func @transform_1(%arg0: i32) -> (i32, i32) {
    %c0_i32 = arith.constant 0 : i32
    %c0_i32_0 = arith.constant 0 : i32
    return %arg0, %c0_i32 : i32, i32
  }
  func.func @transform_2(%arg0: i32) -> (i32, i32) {
    %c0_i32 = arith.constant 0 : i32
    %c0_i32_0 = arith.constant 0 : i32
    %c0_i32_1 = arith.constant 0 : i32
    return %c0_i32, %c0_i32_0 : i32, i32
  }
  func.func @transform_3(%arg0: i32) -> (i32, i32) {
    %c0_i32 = arith.constant 0 : i32
    %c0_i32_0 = arith.constant 0 : i32
    %c0_i32_1 = arith.constant 0 : i32
    return %c0_i32, %c0_i32_0 : i32, i32
  }
  func.func @transform_4(%arg0: i32) -> (i32, i32) {
    %c0_i32 = arith.constant 0 : i32
    %c0_i32_0 = arith.constant 0 : i32
    return %arg0, %c0_i32 : i32, i32
  }
}

</mosaic_0001>

<llo_original>
// kernel: factorized_tdnn_forward.3
$region0: #{factorized_tdnn_forward.3}
  #allocation0 [shape = 'u32[]', space=smem, size = 0x4, offset = 0x4, fixed_abs, tag = 'smem constant byte address 0x4 - core index']
  #allocation1 [shape = 'u32[144,128]{1,0:T(1,128)}', space=vmem, size = 0x12000, scoped, tag = 'internal scratch']
  %s0 = inlined_call_operand.vmem [shape: f32[160,128], index: 0, kind: input, shape index: {}]
  %s1 = inlined_call_operand.vmem [shape: f32[160,128], index: 1, kind: input, shape index: {}]
  %s2 = inlined_call_operand.vmem [shape: f32[1,128], index: 2, kind: input, shape index: {}]
  %s3 = inlined_call_operand.vmem [shape: f32[1,128], index: 3, kind: input, shape index: {}]
  %s4 = inlined_call_operand.vmem [shape: f32[160,128], index: 4, kind: output, shape index: {}]
  %s5 = sld [smem:[#allocation0]]
  $region26: #{factorized_tdnn_forward.3} parent=0
    _
  %s7 = ssub.s32 1, %s5
  %s8 = scalar_select 0, %s7, %s5
  // Predicated region
  $region2: #{factorized_tdnn_forward.3} parent=0 // pred_check
    _
  $region3: #{factorized_tdnn_forward.3} parent=0 // pred_check_branch
    %10 = sbr.rel (0) target = $region5
  $region4: #{factorized_tdnn_forward.3} parent=0 // pred_region
    _
  $region5: #{factorized_tdnn_forward.3} parent=0 // pred_fallthru
    _
  // Predicated region
  $region6: #{factorized_tdnn_forward.3} parent=0 // pred_check
    _
  $region7: #{factorized_tdnn_forward.3} parent=0 // pred_check_branch
    %12 = sbr.rel (0) target = $region9
  $region8: #{factorized_tdnn_forward.3} parent=0 // pred_region
    _
  $region9: #{factorized_tdnn_forward.3} parent=0 // pred_fallthru
    _
  // Predicated region
  $region10: #{factorized_tdnn_forward.3} parent=0 // pred_check
    _
  $region11: #{factorized_tdnn_forward.3} parent=0 // pred_check_branch
    %14 = sbr.rel (0) target = $region13
  $region12: #{factorized_tdnn_forward.3} parent=0 // pred_region
    _
  $region13: #{factorized_tdnn_forward.3} parent=0 // pred_fallthru
    _
  // Predicated region
  $region14: #{factorized_tdnn_forward.3} parent=0 // pred_check
    _
  $region15: #{factorized_tdnn_forward.3} parent=0 // pred_check_branch
    %16 = sbr.rel (0) target = $region17
  $region16: #{factorized_tdnn_forward.3} parent=0 // pred_region
    _
  $region17: #{factorized_tdnn_forward.3} parent=0 // pred_fallthru
    _
  %v17 = vld [vmem:[%s0] sm:$0xff]
  %v18 = vld [vmem:[%s0 + $0x8] sm:$0xff]
  %v19 = vld [vmem:[%s0 + $0x10] sm:$0xff]
  %v20 = vld [vmem:[%s0 + $0x18] sm:$0xff]
  %v21 = vld [vmem:[%s0 + $0x20] sm:$0xff]
  %v22 = vld [vmem:[%s0 + $0x28] sm:$0xff]
  %v23 = vld [vmem:[%s0 + $0x30] sm:$0xff]
  %v24 = vld [vmem:[%s0 + $0x38] sm:$0xff]
  %v25 = vld [vmem:[%s0 + $0x40] sm:$0xff]
  %v26 = vld [vmem:[%s0 + $0x48] sm:$0xff]
  %v27 = vld [vmem:[%s0 + $0x50] sm:$0xff]
  %v28 = vld [vmem:[%s0 + $0x58] sm:$0xff]
  %v29 = vld [vmem:[%s0 + $0x60] sm:$0xff]
  %v30 = vld [vmem:[%s0 + $0x68] sm:$0xff]
  %v31 = vld [vmem:[%s0 + $0x70] sm:$0xff]
  %v32 = vld [vmem:[%s0 + $0x78] sm:$0xff]
  %v33 = vld [vmem:[%s0 + $0x80] sm:$0xff]
  %v34 = vld [vmem:[%s0 + $0x88] sm:$0xff]
  %v35 = vld [vmem:[%s0 + $0x90] sm:$0xff]
  %v36 = vld [vmem:[%s0 + $0x98] sm:$0xff]
  %v37 = vld [vmem:[%s1] sm:$0xff]
  %v38 = vld [vmem:[%s1 + $0x8] sm:$0xff]
  %v39 = vld [vmem:[%s1 + $0x10] sm:$0xff]
  %v40 = vld [vmem:[%s1 + $0x18] sm:$0xff]
  %v41 = vld [vmem:[%s1 + $0x20] sm:$0xff]
  %v42 = vld [vmem:[%s1 + $0x28] sm:$0xff]
  %v43 = vld [vmem:[%s1 + $0x30] sm:$0xff]
  %v44 = vld [vmem:[%s1 + $0x38] sm:$0xff]
  %v45 = vld [vmem:[%s1 + $0x40] sm:$0xff]
  %v46 = vld [vmem:[%s1 + $0x48] sm:$0xff]
  %v47 = vld [vmem:[%s1 + $0x50] sm:$0xff]
  %v48 = vld [vmem:[%s1 + $0x58] sm:$0xff]
  %v49 = vld [vmem:[%s1 + $0x60] sm:$0xff]
  %v50 = vld [vmem:[%s1 + $0x68] sm:$0xff]
  %v51 = vld [vmem:[%s1 + $0x70] sm:$0xff]
  %v52 = vld [vmem:[%s1 + $0x78] sm:$0xff]
  %v53 = vld [vmem:[%s1 + $0x80] sm:$0xff]
  %v54 = vld [vmem:[%s1 + $0x88] sm:$0xff]
  %v55 = vld [vmem:[%s1 + $0x90] sm:$0xff]
  %v56 = vld [vmem:[%s1 + $0x98] sm:$0xff]
  %v57 = vmul.f32 %v37, 0.66
  %v58 = vmul.f32 %v38, 0.66
  %v59 = vmul.f32 %v39, 0.66
  %v60 = vmul.f32 %v40, 0.66
  %v61 = vmul.f32 %v41, 0.66
  %v62 = vmul.f32 %v42, 0.66
  %v63 = vmul.f32 %v43, 0.66
  %v64 = vmul.f32 %v44, 0.66
  %v65 = vmul.f32 %v45, 0.66
  %v66 = vmul.f32 %v46, 0.66
  %v67 = vmul.f32 %v47, 0.66
  %v68 = vmul.f32 %v48, 0.66
  %v69 = vmul.f32 %v49, 0.66
  %v70 = vmul.f32 %v50, 0.66
  %v71 = vmul.f32 %v51, 0.66
  %v72 = vmul.f32 %v52, 0.66
  %v73 = vmul.f32 %v53, 0.66
  %v74 = vmul.f32 %v54, 0.66
  %v75 = vmul.f32 %v55, 0.66
  %v76 = vmul.f32 %v56, 0.66
  %v77 = vld [vmem:[%s2] sm:$0x1]
  %v79 = vlaneseq
  %v80 = vshrl.u32 %v79, 7
  %v81 = vsub.s32 0, %v80
  %v82 = vrot.slane %v77, %v81
  %v84 = vmul.f32 %v17, %v82
  %v85 = vmul.f32 %v18, %v82
  %v86 = vmul.f32 %v19, %v82
  %v87 = vmul.f32 %v20, %v82
  %v88 = vmul.f32 %v21, %v82
  %v89 = vmul.f32 %v22, %v82
  %v90 = vmul.f32 %v23, %v82
  %v91 = vmul.f32 %v24, %v82
  %v92 = vmul.f32 %v25, %v82
  %v93 = vmul.f32 %v26, %v82
  %v94 = vmul.f32 %v27, %v82
  %v95 = vmul.f32 %v28, %v82
  %v96 = vmul.f32 %v29, %v82
  %v97 = vmul.f32 %v30, %v82
  %v98 = vmul.f32 %v31, %v82
  %v99 = vmul.f32 %v32, %v82
  %v100 = vmul.f32 %v33, %v82
  %v101 = vmul.f32 %v34, %v82
  %v102 = vmul.f32 %v35, %v82
  %v103 = vmul.f32 %v36, %v82
  %v104 = vadd.f32 %v57, %v84
  %v105 = vadd.f32 %v58, %v85
  %v106 = vadd.f32 %v59, %v86
  %v107 = vadd.f32 %v60, %v87
  %v108 = vadd.f32 %v61, %v88
  %v109 = vadd.f32 %v62, %v89
  %v110 = vadd.f32 %v63, %v90
  %v111 = vadd.f32 %v64, %v91
  %v112 = vadd.f32 %v65, %v92
  %v113 = vadd.f32 %v66, %v93
  %v114 = vadd.f32 %v67, %v94
  %v115 = vadd.f32 %v68, %v95
  %v116 = vadd.f32 %v69, %v96
  %v117 = vadd.f32 %v70, %v97
  %v118 = vadd.f32 %v71, %v98
  %v119 = vadd.f32 %v72, %v99
  %v120 = vadd.f32 %v73, %v100
  %v121 = vadd.f32 %v74, %v101
  %v122 = vadd.f32 %v75, %v102
  %v123 = vadd.f32 %v76, %v103
  %v124 = vld [vmem:[%s3] sm:$0x1]
  %v126 = vlaneseq
  %v127 = vshrl.u32 %v126, 7
  %v128 = vsub.s32 0, %v127
  %v129 = vrot.slane %v124, %v128
  %v131 = vadd.f32 %v104, %v129
  %v132 = vadd.f32 %v105, %v129
  %v133 = vadd.f32 %v106, %v129
  %v134 = vadd.f32 %v107, %v129
  %v135 = vadd.f32 %v108, %v129
  %v136 = vadd.f32 %v109, %v129
  %v137 = vadd.f32 %v110, %v129
  %v138 = vadd.f32 %v111, %v129
  %v139 = vadd.f32 %v112, %v129
  %v140 = vadd.f32 %v113, %v129
  %v141 = vadd.f32 %v114, %v129
  %v142 = vadd.f32 %v115, %v129
  %v143 = vadd.f32 %v116, %v129
  %v144 = vadd.f32 %v117, %v129
  %v145 = vadd.f32 %v118, %v129
  %v146 = vadd.f32 %v119, %v129
  %v147 = vadd.f32 %v120, %v129
  %v148 = vadd.f32 %v121, %v129
  %v149 = vadd.f32 %v122, %v129
  %v150 = vadd.f32 %v123, %v129
  %151 = vst [vmem:[%s4] sm:$0xff] %v131
  %152 = vst [vmem:[%s4 + $0x8] sm:$0xff] %v132
  %153 = vst [vmem:[%s4 + $0x10] sm:$0xff] %v133
  %154 = vst [vmem:[%s4 + $0x18] sm:$0xff] %v134
  %155 = vst [vmem:[%s4 + $0x20] sm:$0xff] %v135
  %156 = vst [vmem:[%s4 + $0x28] sm:$0xff] %v136
  %157 = vst [vmem:[%s4 + $0x30] sm:$0xff] %v137
  %158 = vst [vmem:[%s4 + $0x38] sm:$0xff] %v138
  %159 = vst [vmem:[%s4 + $0x40] sm:$0xff] %v139
  %160 = vst [vmem:[%s4 + $0x48] sm:$0xff] %v140
  %161 = vst [vmem:[%s4 + $0x50] sm:$0xff] %v141
  %162 = vst [vmem:[%s4 + $0x58] sm:$0xff] %v142
  %163 = vst [vmem:[%s4 + $0x60] sm:$0xff] %v143
  %164 = vst [vmem:[%s4 + $0x68] sm:$0xff] %v144
  %165 = vst [vmem:[%s4 + $0x70] sm:$0xff] %v145
  %166 = vst [vmem:[%s4 + $0x78] sm:$0xff] %v146
  %167 = vst [vmem:[%s4 + $0x80] sm:$0xff] %v147
  %168 = vst [vmem:[%s4 + $0x88] sm:$0xff] %v148
  %169 = vst [vmem:[%s4 + $0x90] sm:$0xff] %v149
  %170 = vst [vmem:[%s4 + $0x98] sm:$0xff] %v150
  // Predicated region
  $region18: #{factorized_tdnn_forward.3} parent=0 // pred_check
    _
  $region19: #{factorized_tdnn_forward.3} parent=0 // pred_check_branch
    %172 = sbr.rel (0) target = $region21
  $region20: #{factorized_tdnn_forward.3} parent=0 // pred_region
    _
  $region21: #{factorized_tdnn_forward.3} parent=0 // pred_fallthru
    _
  // Predicated region
  $region22: #{factorized_tdnn_forward.3} parent=0 // pred_check
    _
  $region23: #{factorized_tdnn_forward.3} parent=0 // pred_check_branch
    %174 = sbr.rel (0) target = $region25
  $region24: #{factorized_tdnn_forward.3} parent=0 // pred_region
    _
  $region25: #{factorized_tdnn_forward.3} parent=0 // pred_fallthru
    _

// kernel: factorized_tdnn_forward.2
$region0: #{factorized_tdnn_forward.2}
  #allocation0 [shape = 'u32[]', space=smem, size = 0x4, offset = 0x4, fixed_abs, tag = 'smem constant byte address 0x4 - core index']
  #allocation1 [shape = 'u32[144,128]{1,0:T(1,128)}', space=vmem, size = 0x12000, scoped, tag = 'internal scratch']
  #allocation2 [shape = 'f32[2,24,128]{2,1,0:T(8,128)}', space=vmem, size = 0x6000, scoped, tag = 'scratch operand']
  #allocation3 [shape = 's32[2]{0}', space=sflag, size = 0x8, scoped, tag = 'scratch operand']
  #allocation4 [shape = 's32[]', space=sflag, size = 0x4, offset = 0, fixed_abs, tag = 'sflag constant byte address 0x0 - dummy sync flag']
  #allocation5 [shape = 's32[]', space=sflag, size = 0x4, offset = 0, fixed_abs, tag = 'sflag constant byte address 0x0 - dummy sync flag']
  %s0 = inlined_call_operand.vmem [shape: f32[176,128], index: 0, kind: input, shape index: {}]
  %s1 = inlined_call_operand.vmem [shape: f32[3,128,128], index: 1, kind: input, shape index: {}]
  %s2 = inlined_call_operand.vmem [shape: f32[128,128], index: 2, kind: input, shape index: {}]
  %s3 = inlined_call_operand.vmem [shape: f32[1,128], index: 3, kind: input, shape index: {}]
  %s4 = inlined_call_operand.vmem [shape: f32[160,128], index: 4, kind: output, shape index: {0}]
  %s5 = inlined_call_operand.vmem [shape: f32[160,128], index: 5, kind: output, shape index: {1}]
  %s6 = inlined_call_operand.vmem [shape: f32[80,128], index: 6, kind: output, shape index: {2}]
  %7 = xla_tuple %s4, %s5, %s6
  %s8 = sld [smem:[#allocation0]]
  $region137: #{factorized_tdnn_forward.2} parent=0
    _
  %s10 = ssub.s32 1, %s8
  %s11 = scalar_select 0, %s10, %s8
  loop: start=0, step=1, limit=12
  $region2: #{factorized_tdnn_forward.2} parent=0 // loop_pre_header
    _
  $region3: #{factorized_tdnn_forward.2} parent=0 // loop_header
    %s13 = sphi 0, %s17
    %p14 = scmp.ge.s32.totalorder %s13, 12
    %s20 = sphi 0, %s32
    %s21 = sphi 0, %s28
    %s22 = sphi 0, %s20
    %s23 = sphi 0, %s21
    %s24 = sphi 0, %s22
    %s25 = sphi 0, %s23
    %s33 = sphi 0, %s33
    %s35 = sphi 0, %s33
    %s36 = sphi 0, %s35
    %s50 = sphi 0, %s36
    %s54 = sphi 0, %s54
    %s56 = sphi 0, %s54
    %s57 = sphi 0, %s56
    %s71 = sphi 0, %s57
    %s75 = sphi 0, %s75
    %s77 = sphi 0, %s75
    %s78 = sphi 0, %s77
    %s92 = sphi 0, %s78
    %s102 = sphi 0, %s104
    %s105 = sphi 0, %s102
    %s106 = sphi 0, %s105
    %s122 = sphi 0, %s106
    %s132 = sphi 0, %s134
    %s135 = sphi 0, %s132
    %s136 = sphi 0, %s135
    %s152 = sphi 0, %s136
    %s162 = sphi 0, %s164
    %s165 = sphi 0, %s162
    %s166 = sphi 0, %s165
    %s182 = sphi 0, %s166
  $region4: #{factorized_tdnn_forward.2} parent=0 // loop_header_branch
    %16 = sbr.rel (%p14) target = $region8
  $region5: #{factorized_tdnn_forward.2} parent=0 // loop_body
    %s18 = ssub.s32 %s13, 1
    %s19 = ssub.s32 %s13, 2
    %s26 = sadd.s32 1, %s21
    %p27 = scmp.ge.s32.totalorder %s26, 5
    %s28 = scalar_select %p27, 0, %s26
    %s29 = sadd.s32 1, %s20
    %s30 = scalar_select %p27, %s29, %s20
    %p31 = scmp.ge.s32.totalorder %s30, 2
    %s32 = scalar_select %p31, 0, %s30
    %s34 = sadd.s32 %s33, 1
    %p37 = scmp.eq.s32.totalorder %s13, 9
    %p38 = scmp.ne.s32.totalorder %s33, %s35
    %p39 = scmp.eq.s32.totalorder %s13, 0
    %p40 = por %p38, %p39
    %p41 = scmp.ne.s32.totalorder %s33, %s35
    %p42 = scmp.eq.s32.totalorder %s18, 9
    %p43 = por %p41, %p42
    %p44 = scmp.ne.s32.totalorder %s35, %s36
    %p45 = scmp.eq.s32.totalorder %s18, 0
    %p46 = por %p44, %p45
    %p47 = scmp.ne.s32.totalorder %s35, %s36
    %p48 = scmp.eq.s32.totalorder %s19, 9
    %p49 = por %p47, %p48
    %p51 = scmp.ne.s32.totalorder %s36, %s50
    %p52 = scmp.eq.s32.totalorder %s19, 0
    %p53 = por %p51, %p52
    %s55 = sadd.s32 %s54, 1
    %p58 = scmp.eq.s32.totalorder %s13, 9
    %p59 = scmp.ne.s32.totalorder %s54, %s56
    %p60 = scmp.eq.s32.totalorder %s13, 0
    %p61 = por %p59, %p60
    %p62 = scmp.ne.s32.totalorder %s54, %s56
    %p63 = scmp.eq.s32.totalorder %s18, 9
    %p64 = por %p62, %p63
    %p65 = scmp.ne.s32.totalorder %s56, %s57
    %p66 = scmp.eq.s32.totalorder %s18, 0
    %p67 = por %p65, %p66
    %p68 = scmp.ne.s32.totalorder %s56, %s57
    %p69 = scmp.eq.s32.totalorder %s19, 9
    %p70 = por %p68, %p69
    %p72 = scmp.ne.s32.totalorder %s57, %s71
    %p73 = scmp.eq.s32.totalorder %s19, 0
    %p74 = por %p72, %p73
    %s76 = sadd.s32 %s75, 1
    %p79 = scmp.eq.s32.totalorder %s13, 9
    %p80 = scmp.ne.s32.totalorder %s75, %s77
    %p81 = scmp.eq.s32.totalorder %s13, 0
    %p82 = por %p80, %p81
    %p83 = scmp.ne.s32.totalorder %s75, %s77
    %p84 = scmp.eq.s32.totalorder %s18, 9
    %p85 = por %p83, %p84
    %p86 = scmp.ne.s32.totalorder %s77, %s78
    %p87 = scmp.eq.s32.totalorder %s18, 0
    %p88 = por %p86, %p87
    %p89 = scmp.ne.s32.totalorder %s77, %s78
    %p90 = scmp.eq.s32.totalorder %s19, 9
    %p91 = por %p89, %p90
    %p93 = scmp.ne.s32.totalorder %s78, %s92
    %p94 = scmp.eq.s32.totalorder %s19, 0
    %p95 = por %p93, %p94
    %s96 = smul.u32 %s20, 5
    %s97 = sadd.s32 %s96, %s21
    %s98 = smul.u32 %s32, 5
    %s99 = sadd.s32 %s98, %s28
    %s100 = ssub.s32 %s97, %s99
    %p101 = scmp.eq.s32.totalorder %s100, 0
    %s103 = sadd.s32 %s102, 1
    %s104 = scalar_select %p101, %s102, %s103
    %p107 = pneg %p101
    %p108 = scmp.eq.s32.totalorder %s13, 9
    %p109 = por %p107, %p108
    %p110 = scmp.ne.s32.totalorder %s102, %s105
    %p111 = scmp.eq.s32.totalorder %s13, 0
    %p112 = por %p110, %p111
    %p113 = scmp.ne.s32.totalorder %s102, %s105
    %p114 = scmp.eq.s32.totalorder %s18, 9
    %p115 = por %p113, %p114
    %p116 = scmp.ne.s32.totalorder %s105, %s106
    %p117 = scmp.eq.s32.totalorder %s18, 0
    %p118 = por %p116, %p117
    %p119 = scmp.ne.s32.totalorder %s105, %s106
    %p120 = scmp.eq.s32.totalorder %s19, 9
    %p121 = por %p119, %p120
    %p123 = scmp.ne.s32.totalorder %s106, %s122
    %p124 = scmp.eq.s32.totalorder %s19, 0
    %p125 = por %p123, %p124
    %s126 = smul.u32 %s20, 5
    %s127 = sadd.s32 %s126, %s21
    %s128 = smul.u32 %s32, 5
    %s129 = sadd.s32 %s128, %s28
    %s130 = ssub.s32 %s127, %s129
    %p131 = scmp.eq.s32.totalorder %s130, 0
    %s133 = sadd.s32 %s132, 1
    %s134 = scalar_select %p131, %s132, %s133
    %p137 = pneg %p131
    %p138 = scmp.eq.s32.totalorder %s13, 9
    %p139 = por %p137, %p138
    %p140 = scmp.ne.s32.totalorder %s132, %s135
    %p141 = scmp.eq.s32.totalorder %s13, 0
    %p142 = por %p140, %p141
    %p143 = scmp.ne.s32.totalorder %s132, %s135
    %p144 = scmp.eq.s32.totalorder %s18, 9
    %p145 = por %p143, %p144
    %p146 = scmp.ne.s32.totalorder %s135, %s136
    %p147 = scmp.eq.s32.totalorder %s18, 0
    %p148 = por %p146, %p147
    %p149 = scmp.ne.s32.totalorder %s135, %s136
    %p150 = scmp.eq.s32.totalorder %s19, 9
    %p151 = por %p149, %p150
    %p153 = scmp.ne.s32.totalorder %s136, %s152
    %p154 = scmp.eq.s32.totalorder %s19, 0
    %p155 = por %p153, %p154
    %s156 = smul.u32 %s20, 5
    %s157 = sadd.s32 %s156, %s21
    %s158 = smul.u32 %s32, 5
    %s159 = sadd.s32 %s158, %s28
    %s160 = ssub.s32 %s157, %s159
    %p161 = scmp.eq.s32.totalorder %s160, 0
    %s163 = sadd.s32 %s162, 1
    %s164 = scalar_select %p161, %s162, %s163
    %p167 = pneg %p161
    %p168 = scmp.eq.s32.totalorder %s13, 9
    %p169 = por %p167, %p168
    %p170 = scmp.ne.s32.totalorder %s162, %s165
    %p171 = scmp.eq.s32.totalorder %s13, 0
    %p172 = por %p170, %p171
    %p173 = scmp.ne.s32.totalorder %s162, %s165
    %p174 = scmp.eq.s32.totalorder %s18, 9
    %p175 = por %p173, %p174
    %p176 = scmp.ne.s32.totalorder %s165, %s166
    %p177 = scmp.eq.s32.totalorder %s18, 0
    %p178 = por %p176, %p177
    %p179 = scmp.ne.s32.totalorder %s165, %s166
    %p180 = scmp.eq.s32.totalorder %s19, 9
    %p181 = por %p179, %p180
    %p183 = scmp.ne.s32.totalorder %s166, %s182
    %p184 = scmp.eq.s32.totalorder %s19, 0
    %p185 = por %p183, %p184
    %p186 = scmp.le.s32.totalorder 1, %s13
    %p187 = scmp.lt.s32.totalorder %s13, 11
    %p188 = pnand %p186, %p187
    %p189 = pneg %p188
    // Predicated region
    $region9: #{factorized_tdnn_forward.2} parent=5 // pred_check
      _
    $region10: #{factorized_tdnn_forward.2} parent=5 // pred_check_branch
      %191 = sbr.rel (%p188) target = $region12
    $region11: #{factorized_tdnn_forward.2} parent=5 // pred_region
      %s192 = ssub.s32 %s13, 1
      // Predicated region
      $region13: #{factorized_tdnn_forward.2} parent=11 // pred_check
        %p193 = pneg %p46
      $region14: #{factorized_tdnn_forward.2} parent=11 // pred_check_branch
        %195 = sbr.rel (%p193) target = $region16
      $region15: #{factorized_tdnn_forward.2} parent=11 // pred_region
        _
      $region16: #{factorized_tdnn_forward.2} parent=11 // pred_fallthru
        _
      // Predicated region
      $region17: #{factorized_tdnn_forward.2} parent=11 // pred_check
        %p196 = pneg %p67
      $region18: #{factorized_tdnn_forward.2} parent=11 // pred_check_branch
        %198 = sbr.rel (%p196) target = $region20
      $region19: #{factorized_tdnn_forward.2} parent=11 // pred_region
        _
      $region20: #{factorized_tdnn_forward.2} parent=11 // pred_fallthru
        _
      // Predicated region
      $region21: #{factorized_tdnn_forward.2} parent=11 // pred_check
        %p199 = pneg %p88
      $region22: #{factorized_tdnn_forward.2} parent=11 // pred_check_branch
        %201 = sbr.rel (%p199) target = $region24
      $region23: #{factorized_tdnn_forward.2} parent=11 // pred_region
        _
      $region24: #{factorized_tdnn_forward.2} parent=11 // pred_fallthru
        _
    $region12: #{factorized_tdnn_forward.2} parent=5 // pred_fallthru
      _
    %p202 = scmp.lt.s32.totalorder %s13, 10
    // Predicated region
    $region25: #{factorized_tdnn_forward.2} parent=5 // pred_check
      %p203 = pneg %p202
    $region26: #{factorized_tdnn_forward.2} parent=5 // pred_check_branch
      %205 = sbr.rel (%p203) target = $region28
    $region27: #{factorized_tdnn_forward.2} parent=5 // pred_region
      _
    $region28: #{factorized_tdnn_forward.2} parent=5 // pred_fallthru
      _
    %p206 = scmp.le.s32.totalorder 1, %s13
    %p207 = scmp.lt.s32.totalorder %s13, 11
    %p208 = pnand %p206, %p207
    %p209 = pneg %p208
    // Predicated region
    $region29: #{factorized_tdnn_forward.2} parent=5 // pred_check
      _
    $region30: #{factorized_tdnn_forward.2} parent=5 // pred_check_branch
      %211 = sbr.rel (%p208) target = $region32
    $region31: #{factorized_tdnn_forward.2} parent=5 // pred_region
      %s212 = ssub.s32 %s13, 1
      %p213 = pneg %p46
      %p214 = pneg %p43
      %p215 = pneg %p67
      %p216 = pneg %p64
      %p217 = pneg %p88
      %p218 = pneg %p85
      %p219 = pneg %p118
      %p220 = pneg %p115
      %s221 = smul.u32 %s22, 5
      %s222 = sadd.s32 %s221, %s23
      %s223 = smul.u32 2, %s222
      %p224 = scmp.lt.s32.totalorder %s223, 19
      %s225 = scalar_select %p224, %s223, 19
      %s226 = smul.addr %s225, 8
      %s227 = scalar_lea.vmem %s4, %s226
      %p228 = pneg %p148
      %p229 = pneg %p145
      %s230 = smul.u32 %s22, 5
      %s231 = sadd.s32 %s230, %s23
      %s232 = smul.u32 2, %s231
      %p233 = scmp.lt.s32.totalorder %s232, 19
      %s234 = scalar_select %p233, %s232, 19
      %s235 = smul.addr %s234, 8
      %s236 = scalar_lea.vmem %s5, %s235
      %p237 = pneg %p178
      %p238 = pneg %p175
      %s239 = smul.u32 %s22, 5
      %s240 = sadd.s32 %s239, %s23
      %p241 = scmp.lt.s32.totalorder %s240, 9
      %s242 = scalar_select %p241, %s240, 9
      %s243 = smul.addr %s242, 8
      %s244 = scalar_lea.vmem %s6, %s243
      %s245 = smul.u32 %s22, 5
      %s246 = sadd.s32 %s245, %s23
      %s247 = smul.u32 2, %s246
      %p248 = scmp.lt.s32.totalorder %s247, 19
      %s249 = scalar_select %p248, %s247, 19
      %s250 = smul.addr %s249, 8
      %s251 = scalar_lea.vmem %s4, %s250
      %s252 = smul.u32 %s22, 5
      %s253 = sadd.s32 %s252, %s23
      %s254 = smul.u32 2, %s253
      %s255 = smul.u32 %s22, 5
      %s256 = sadd.s32 %s255, %s23
      %s257 = smul.u32 2, %s256
      %p258 = scmp.lt.s32.totalorder %s257, 19
      %s259 = scalar_select %p258, %s257, 19
      %s260 = smul.addr %s259, 8
      %s261 = scalar_lea.vmem %s5, %s260
      %s262 = smul.u32 %s22, 5
      %s263 = sadd.s32 %s262, %s23
      %s264 = smul.u32 2, %s263
      %s265 = smul.u32 %s22, 5
      %s266 = sadd.s32 %s265, %s23
      %p267 = scmp.lt.s32.totalorder %s266, 9
      %s268 = scalar_select %p267, %s266, 9
      %s269 = smul.addr %s268, 8
      %s270 = scalar_lea.vmem %s6, %s269
      %s271 = smul.u32 %s22, 5
      %s272 = sadd.s32 %s271, %s23
      %p273 = scmp.lt.s32.totalorder %s23, 0
      %s274 = ssub.s32 0, %s23
      %s275 = scalar_select %p273, %s274, %s23
      %s276 = sand.u32 %s275, 1
      %s277 = ssub.s32 0, %s276
      %s278 = scalar_select %p273, %s277, %s276
      %p279 = scmp.ne.s32.totalorder %s278, 0
      %p280 = scmp.lt.s32.totalorder %s278, 0
      %p281 = pnand %p280, %p279
      %p282 = pneg %p281
      %s283 = sadd.s32 %s278, 2
      %s284 = scalar_select %p282, %s283, %s278
      %p285 = scmp.eq.s32.totalorder %s23, 0
      // Predicated region
      $region33: #{factorized_tdnn_forward.2} parent=31 // pred_check
        %p286 = pneg %p285
      $region34: #{factorized_tdnn_forward.2} parent=31 // pred_check_branch
        %288 = sbr.rel (%p286) target = $region36
      $region35: #{factorized_tdnn_forward.2} parent=31 // pred_region
        %s289 = smul.u32 %s22, 88
        %s290 = smul.u32 %s23, 16
        %s291 = sadd.s32 %s289, %s290
        %s292 = scalar_lea.vmem %s0, %s291
        %s293 = smul.u32 %s284, 24
        %s294 = scalar_lea.vmem [#allocation2], %s293
        %s295 = scalar_lea.sflag [#allocation3], %s284
        %p297 = scmp.lt.u32.totalorder 24, 8
        %p298 = pneg %p297
        // Predicated region
        $region37: #{factorized_tdnn_forward.2} parent=35 // pred_check
          _
        $region38: #{factorized_tdnn_forward.2} parent=35 // pred_check_branch
          %300 = sbr.rel (%p297) target = $region40
        $region39: #{factorized_tdnn_forward.2} parent=35 // pred_region
          %s315 = sand.u32 24, 7
          %p316 = scmp.eq.s32.totalorder %s315, 0
          // Predicated region
          $region52: #{factorized_tdnn_forward.2} parent=39 // pred_check
            %p317 = pneg %p316
          $region53: #{factorized_tdnn_forward.2} parent=39 // pred_check_branch
            %319 = sbr.rel (%p317) target = $region55
          $region54: #{factorized_tdnn_forward.2} parent=39 // pred_region
            loop: start=0, step=1, limit=1
            $region56: #{factorized_tdnn_forward.2} parent=54 // loop_pre_header
              _
            $region57: #{factorized_tdnn_forward.2} parent=54 // loop_header
              %s321 = sphi 0, %s325
              %p322 = scmp.ge.s32.totalorder %s321, 1
              %s326 = sphi %s292, %s292
              %s327 = sphi %s294, %s294
            $region58: #{factorized_tdnn_forward.2} parent=54 // loop_header_branch
              %324 = sbr.rel (%p322) target = $region62
            $region59: #{factorized_tdnn_forward.2} parent=54 // loop_body
              %v328 = vld [vmem:[%s326] sm:$0xff]
              %329 = vst [vmem:[%s327] sm:$0xff] %v328
              %v330 = vld [vmem:[%s326 + $0x8] sm:$0xff]
              %331 = vst [vmem:[%s327 + $0x8] sm:$0xff] %v330
              %v332 = vld [vmem:[%s326 + $0x10] sm:$0xff]
              %333 = vst [vmem:[%s327 + $0x10] sm:$0xff] %v332
            $region60: #{factorized_tdnn_forward.2} parent=54 // loop_footer
              %s325 = sadd.s32 1, %s321
            $region61: #{factorized_tdnn_forward.2} parent=54 // loop_footer_branch
              %320 = sbr.rel target = $region57
            $region62: #{factorized_tdnn_forward.2} parent=54 // loop_exit
              _
          $region55: #{factorized_tdnn_forward.2} parent=39 // pred_fallthru
            _
          %p334 = pneg %p316
          // Predicated region
          $region63: #{factorized_tdnn_forward.2} parent=39 // pred_check
            _
          $region64: #{factorized_tdnn_forward.2} parent=39 // pred_check_branch
            %336 = sbr.rel (%p316) target = $region66
          $region65: #{factorized_tdnn_forward.2} parent=39 // pred_region
            %s337 = sand.u32 24, 7
          $region66: #{factorized_tdnn_forward.2} parent=39 // pred_fallthru
            _
        $region40: #{factorized_tdnn_forward.2} parent=35 // pred_fallthru
          _
        // Predicated region
        $region41: #{factorized_tdnn_forward.2} parent=35 // pred_check
          %p301 = pneg %p297
        $region42: #{factorized_tdnn_forward.2} parent=35 // pred_check_branch
          %303 = sbr.rel (%p301) target = $region44
        $region43: #{factorized_tdnn_forward.2} parent=35 // pred_region
          %s304 = sshllo.u32 0, 24
          loop: start=0, step=1, limit=1
          $region45: #{factorized_tdnn_forward.2} parent=43 // loop_pre_header
            _
          $region46: #{factorized_tdnn_forward.2} parent=43 // loop_header
            %s306 = sphi 0, %s310
            %p307 = scmp.ge.s32.totalorder %s306, 1
            %s311 = sphi %s292, %s292
            %s312 = sphi %s294, %s294
          $region47: #{factorized_tdnn_forward.2} parent=43 // loop_header_branch
            %309 = sbr.rel (%p307) target = $region51
          $region48: #{factorized_tdnn_forward.2} parent=43 // loop_body
            %v313 = vld [vmem:[%s311] sm:%s304]
            %314 = vst [vmem:[%s312] sm:%s304] %v313
          $region49: #{factorized_tdnn_forward.2} parent=43 // loop_footer
            %s310 = sadd.s32 1, %s306
          $region50: #{factorized_tdnn_forward.2} parent=43 // loop_footer_branch
            %305 = sbr.rel target = $region46
          $region51: #{factorized_tdnn_forward.2} parent=43 // loop_exit
            _
        $region44: #{factorized_tdnn_forward.2} parent=35 // pred_fallthru
          _
        // Predicated region
        $region67: #{factorized_tdnn_forward.2} parent=35 // pred_check
          _
        $region68: #{factorized_tdnn_forward.2} parent=35 // pred_check_branch
          %340 = sbr.rel (0) target = $region70
        $region69: #{factorized_tdnn_forward.2} parent=35 // pred_region
          %341 = vsyncadd %s295, 384
        $region70: #{factorized_tdnn_forward.2} parent=35 // pred_fallthru
          _
      $region36: #{factorized_tdnn_forward.2} parent=31 // pred_fallthru
        _
      %s342 = smul.u32 %s22, 88
      %s343 = smul.u32 %s23, 16
      %s344 = smul.u32 %s284, 24
      %s345 = scalar_lea.vmem [#allocation2], %s344
      %s346 = scalar_lea.sflag [#allocation3], %s284
      %s347 = smul.u32 24, 1
      %s348 = sshll.u32 %s347, 4
      %349 = dma.done %s346, %s348
      %s350 = sadd.s32 %s23, 1
      %p351 = scmp.lt.s32.totalorder %s350, 5
      // Predicated region
      $region71: #{factorized_tdnn_forward.2} parent=31 // pred_check
        %p352 = pneg %p351
      $region72: #{factorized_tdnn_forward.2} parent=31 // pred_check_branch
        %354 = sbr.rel (%p352) target = $region74
      $region73: #{factorized_tdnn_forward.2} parent=31 // pred_region
        %s355 = ssub.s32 1, %s284
        %s356 = smul.u32 %s350, 16
        %s357 = sadd.s32 %s342, %s356
        %s358 = scalar_lea.vmem %s0, %s357
        %s359 = smul.u32 %s355, 24
        %s360 = scalar_lea.vmem [#allocation2], %s359
        %s361 = scalar_lea.sflag [#allocation3], %s355
        %p363 = scmp.lt.u32.totalorder 24, 8
        %p364 = pneg %p363
        // Predicated region
        $region75: #{factorized_tdnn_forward.2} parent=73 // pred_check
          _
        $region76: #{factorized_tdnn_forward.2} parent=73 // pred_check_branch
          %366 = sbr.rel (%p363) target = $region78
        $region77: #{factorized_tdnn_forward.2} parent=73 // pred_region
          %s381 = sand.u32 24, 7
          %p382 = scmp.eq.s32.totalorder %s381, 0
          // Predicated region
          $region90: #{factorized_tdnn_forward.2} parent=77 // pred_check
            %p383 = pneg %p382
          $region91: #{factorized_tdnn_forward.2} parent=77 // pred_check_branch
            %385 = sbr.rel (%p383) target = $region93
          $region92: #{factorized_tdnn_forward.2} parent=77 // pred_region
            loop: start=0, step=1, limit=1
            $region94: #{factorized_tdnn_forward.2} parent=92 // loop_pre_header
              _
            $region95: #{factorized_tdnn_forward.2} parent=92 // loop_header
              %s387 = sphi 0, %s391
              %p388 = scmp.ge.s32.totalorder %s387, 1
              %s392 = sphi %s358, %s358
              %s393 = sphi %s360, %s360
            $region96: #{factorized_tdnn_forward.2} parent=92 // loop_header_branch
              %390 = sbr.rel (%p388) target = $region100
            $region97: #{factorized_tdnn_forward.2} parent=92 // loop_body
              %v394 = vld [vmem:[%s392] sm:$0xff]
              %395 = vst [vmem:[%s393] sm:$0xff] %v394
              %v396 = vld [vmem:[%s392 + $0x8] sm:$0xff]
              %397 = vst [vmem:[%s393 + $0x8] sm:$0xff] %v396
              %v398 = vld [vmem:[%s392 + $0x10] sm:$0xff]
              %399 = vst [vmem:[%s393 + $0x10] sm:$0xff] %v398
            $region98: #{factorized_tdnn_forward.2} parent=92 // loop_footer
              %s391 = sadd.s32 1, %s387
            $region99: #{factorized_tdnn_forward.2} parent=92 // loop_footer_branch
              %386 = sbr.rel target = $region95
            $region100: #{factorized_tdnn_forward.2} parent=92 // loop_exit
              _
          $region93: #{factorized_tdnn_forward.2} parent=77 // pred_fallthru
            _
          %p400 = pneg %p382
          // Predicated region
          $region101: #{factorized_tdnn_forward.2} parent=77 // pred_check
            _
          $region102: #{factorized_tdnn_forward.2} parent=77 // pred_check_branch
            %402 = sbr.rel (%p382) target = $region104
          $region103: #{factorized_tdnn_forward.2} parent=77 // pred_region
            %s403 = sand.u32 24, 7
          $region104: #{factorized_tdnn_forward.2} parent=77 // pred_fallthru
            _
        $region78: #{factorized_tdnn_forward.2} parent=73 // pred_fallthru
          _
        // Predicated region
        $region79: #{factorized_tdnn_forward.2} parent=73 // pred_check
          %p367 = pneg %p363
        $region80: #{factorized_tdnn_forward.2} parent=73 // pred_check_branch
          %369 = sbr.rel (%p367) target = $region82
        $region81: #{factorized_tdnn_forward.2} parent=73 // pred_region
          %s370 = sshllo.u32 0, 24
          loop: start=0, step=1, limit=1
          $region83: #{factorized_tdnn_forward.2} parent=81 // loop_pre_header
            _
          $region84: #{factorized_tdnn_forward.2} parent=81 // loop_header
            %s372 = sphi 0, %s376
            %p373 = scmp.ge.s32.totalorder %s372, 1
            %s377 = sphi %s358, %s358
            %s378 = sphi %s360, %s360
          $region85: #{factorized_tdnn_forward.2} parent=81 // loop_header_branch
            %375 = sbr.rel (%p373) target = $region89
          $region86: #{factorized_tdnn_forward.2} parent=81 // loop_body
            %v379 = vld [vmem:[%s377] sm:%s370]
            %380 = vst [vmem:[%s378] sm:%s370] %v379
          $region87: #{factorized_tdnn_forward.2} parent=81 // loop_footer
            %s376 = sadd.s32 1, %s372
          $region88: #{factorized_tdnn_forward.2} parent=81 // loop_footer_branch
            %371 = sbr.rel target = $region84
          $region89: #{factorized_tdnn_forward.2} parent=81 // loop_exit
            _
        $region82: #{factorized_tdnn_forward.2} parent=73 // pred_fallthru
          _
        // Predicated region
        $region105: #{factorized_tdnn_forward.2} parent=73 // pred_check
          _
        $region106: #{factorized_tdnn_forward.2} parent=73 // pred_check_branch
          %406 = sbr.rel (0) target = $region108
        $region107: #{factorized_tdnn_forward.2} parent=73 // pred_region
          %407 = vsyncadd %s361, 384
        $region108: #{factorized_tdnn_forward.2} parent=73 // pred_fallthru
          _
      $region74: #{factorized_tdnn_forward.2} parent=31 // pred_fallthru
        _
      %v408 = vld [vmem:[%s345] sm:$0xff]
      %v409 = vld [vmem:[%s345 + $0x8] sm:$0xff]
      %v410 = vld [vmem:[%s1] sm:$0xff]
      %v411 = vld [vmem:[%s1 + $0x8] sm:$0xff]
      %v412 = vld [vmem:[%s1 + $0x10] sm:$0xff]
      %v413 = vld [vmem:[%s1 + $0x18] sm:$0xff]
      %v414 = vld [vmem:[%s1 + $0x20] sm:$0xff]
      %v415 = vld [vmem:[%s1 + $0x28] sm:$0xff]
      %v416 = vld [vmem:[%s1 + $0x30] sm:$0xff]
      %v417 = vld [vmem:[%s1 + $0x38] sm:$0xff]
      %v418 = vld [vmem:[%s1 + $0x40] sm:$0xff]
      %v419 = vld [vmem:[%s1 + $0x48] sm:$0xff]
      %v420 = vld [vmem:[%s1 + $0x50] sm:$0xff]
      %v421 = vld [vmem:[%s1 + $0x58] sm:$0xff]
      %v422 = vld [vmem:[%s1 + $0x60] sm:$0xff]
      %v423 = vld [vmem:[%s1 + $0x68] sm:$0xff]
      %v424 = vld [vmem:[%s1 + $0x70] sm:$0xff]
      %v425 = vld [vmem:[%s1 + $0x78] sm:$0xff]
      %v426 = vld [vmem:[%s345 + $0x1] sm:$0xff]
      %v427 = vld [vmem:[%s345 + $0x9] sm:$0xff]
      %s428 = scalar_lea.vmem %s1, 128
      %v429 = vld [vmem:[%s428] sm:$0xff]
      %v430 = vld [vmem:[%s428 + $0x8] sm:$0xff]
      %v431 = vld [vmem:[%s428 + $0x10] sm:$0xff]
      %v432 = vld [vmem:[%s428 + $0x18] sm:$0xff]
      %v433 = vld [vmem:[%s428 + $0x20] sm:$0xff]
      %v434 = vld [vmem:[%s428 + $0x28] sm:$0xff]
      %v435 = vld [vmem:[%s428 + $0x30] sm:$0xff]
      %v436 = vld [vmem:[%s428 + $0x38] sm:$0xff]
      %v437 = vld [vmem:[%s428 + $0x40] sm:$0xff]
      %v438 = vld [vmem:[%s428 + $0x48] sm:$0xff]
      %v439 = vld [vmem:[%s428 + $0x50] sm:$0xff]
      %v440 = vld [vmem:[%s428 + $0x58] sm:$0xff]
      %v441 = vld [vmem:[%s428 + $0x60] sm:$0xff]
      %v442 = vld [vmem:[%s428 + $0x68] sm:$0xff]
      %v443 = vld [vmem:[%s428 + $0x70] sm:$0xff]
      %v444 = vld [vmem:[%s428 + $0x78] sm:$0xff]
      %445 = vmatprep.subr.mxu0 0.0
      %446 = vmatpush1.msra.mxu0 %v429
      %447 = vmatprep.subr.mxu0 0.0
      %448 = vmatpush1.msra.mxu0 %v430
      %449 = vmatprep.subr.mxu0 0.0
      %450 = vmatpush1.msra.mxu0 %v431
      %451 = vmatprep.subr.mxu0 0.0
      %452 = vmatpush1.msra.mxu0 %v432
      %453 = vmatprep.subr.mxu0 0.0
      %454 = vmatpush1.msra.mxu0 %v433
      %455 = vmatprep.subr.mxu0 0.0
      %456 = vmatpush1.msra.mxu0 %v434
      %457 = vmatprep.subr.mxu0 0.0
      %458 = vmatpush1.msra.mxu0 %v435
      %459 = vmatprep.subr.mxu0 0.0
      %460 = vmatpush1.msra.mxu0 %v436
      %461 = vmatprep.subr.mxu0 0.0
      %462 = vmatpush1.msra.mxu0 %v437
      %463 = vmatprep.subr.mxu0 0.0
      %464 = vmatpush1.msra.mxu0 %v438
      %465 = vmatprep.subr.mxu0 0.0
      %466 = vmatpush1.msra.mxu0 %v439
      %467 = vmatprep.subr.mxu0 0.0
      %468 = vmatpush1.msra.mxu0 %v440
      %469 = vmatprep.subr.mxu0 0.0
      %470 = vmatpush1.msra.mxu0 %v441
      %471 = vmatprep.subr.mxu0 0.0
      %472 = vmatpush1.msra.mxu0 %v442
      %473 = vmatprep.subr.mxu0 0.0
      %474 = vmatpush1.msra.mxu0 %v443
      %475 = vmatprep.subr.mxu0 0.0
      %476 = vmatpush1.msra.mxu0 %v444
      %477 = vmatprep.subr.mxu0 0.0
      %478 = vmatpush1.msra.mxu0 0.0
      %479 = vmatprep.subr.mxu0 0.0
      %480 = vmatpush1.msra.mxu0 0.0
      %481 = vmatprep.subr.mxu0 0.0
      %482 = vmatpush1.msra.mxu0 0.0
      %483 = vmatprep.subr.mxu0 0.0
      %484 = vmatpush1.msra.mxu0 0.0
      %485 = vmatprep.subr.mxu0 0.0
      %486 = vmatpush1.msra.mxu0 0.0
      %487 = vmatprep.subr.mxu0 0.0
      %488 = vmatpush1.msra.mxu0 0.0
      %489 = vmatprep.subr.mxu0 0.0
      %490 = vmatpush1.msra.mxu0 0.0
      %491 = vmatprep.subr.mxu0 0.0
      %492 = vmatpush1.msra.mxu0 0.0
      %493 = vmatprep.subr.mxu0 0.0
      %494 = vmatpush1.msra.mxu0 0.0
      %495 = vmatprep.subr.mxu0 0.0
      %496 = vmatpush1.msra.mxu0 0.0
      %497 = vmatprep.subr.mxu0 0.0
      %498 = vmatpush1.msra.mxu0 0.0
      %499 = vmatprep.subr.mxu0 0.0
      %500 = vmatpush1.msra.mxu0 0.0
      %501 = vmatprep.subr.mxu0 0.0
      %502 = vmatpush1.msra.mxu0 0.0
      %503 = vmatprep.subr.mxu0 0.0
      %504 = vmatpush1.msra.mxu0 0.0
      %505 = vmatprep.subr.mxu0 0.0
      %506 = vmatpush1.msra.mxu0 0.0
      %507 = vmatprep.subr.mxu0 0.0
      %508 = vmatpush1.msra.mxu0 0.0
      %509 = vmatprep.mubr.f32.mxu0 0.0
      %510 = vmatmul.mubr.f32.gmra.mrb[0].mxu0 %v426
      %v511 = vpop.f32.mrb[0].mxu0
      %v512 = vadd.f32 0.0, %v511
      %v513 = vpop.f32.mrb[0].mxu0
      %514 = vmatprep.mubr.f32.mxu0 0.0
      %515 = vmatmul.mubr.f32.gmra.mrb[0].mxu0 %v427
      %v516 = vpop.f32.mrb[0].mxu0
      %v517 = vadd.f32 0.0, %v516
      %v518 = vpop.f32.mrb[0].mxu0
      %519 = vdwg.mxu0
      %520 = vmatprep.subr.mxu0 0.0
      %521 = vmatpush1.msra.mxu0 %v410
      %522 = vmatprep.subr.mxu0 0.0
      %523 = vmatpush1.msra.mxu0 %v411
      %524 = vmatprep.subr.mxu0 0.0
      %525 = vmatpush1.msra.mxu0 %v412
      %526 = vmatprep.subr.mxu0 0.0
      %527 = vmatpush1.msra.mxu0 %v413
      %528 = vmatprep.subr.mxu0 0.0
      %529 = vmatpush1.msra.mxu0 %v414
      %530 = vmatprep.subr.mxu0 0.0
      %531 = vmatpush1.msra.mxu0 %v415
      %532 = vmatprep.subr.mxu0 0.0
      %533 = vmatpush1.msra.mxu0 %v416
      %534 = vmatprep.subr.mxu0 0.0
      %535 = vmatpush1.msra.mxu0 %v417
      %536 = vmatprep.subr.mxu0 0.0
      %537 = vmatpush1.msra.mxu0 %v418
      %538 = vmatprep.subr.mxu0 0.0
      %539 = vmatpush1.msra.mxu0 %v419
      %540 = vmatprep.subr.mxu0 0.0
      %541 = vmatpush1.msra.mxu0 %v420
      %542 = vmatprep.subr.mxu0 0.0
      %543 = vmatpush1.msra.mxu0 %v421
      %544 = vmatprep.subr.mxu0 0.0
      %545 = vmatpush1.msra.mxu0 %v422
      %546 = vmatprep.subr.mxu0 0.0
      %547 = vmatpush1.msra.mxu0 %v423
      %548 = vmatprep.subr.mxu0 0.0
      %549 = vmatpush1.msra.mxu0 %v424
      %550 = vmatprep.subr.mxu0 0.0
      %551 = vmatpush1.msra.mxu0 %v425
      %552 = vmatprep.subr.mxu0 0.0
      %553 = vmatpush1.msra.mxu0 0.0
      %554 = vmatprep.subr.mxu0 0.0
      %555 = vmatpush1.msra.mxu0 0.0
      %556 = vmatprep.subr.mxu0 0.0
      %557 = vmatpush1.msra.mxu0 0.0
      %558 = vmatprep.subr.mxu0 0.0
      %559 = vmatpush1.msra.mxu0 0.0
      %560 = vmatprep.subr.mxu0 0.0
      %561 = vmatpush1.msra.mxu0 0.0
      %562 = vmatprep.subr.mxu0 0.0
      %563 = vmatpush1.msra.mxu0 0.0
      %564 = vmatprep.subr.mxu0 0.0
      %565 = vmatpush1.msra.mxu0 0.0
      %566 = vmatprep.subr.mxu0 0.0
      %567 = vmatpush1.msra.mxu0 0.0
      %568 = vmatprep.subr.mxu0 0.0
      %569 = vmatpush1.msra.mxu0 0.0
      %570 = vmatprep.subr.mxu0 0.0
      %571 = vmatpush1.msra.mxu0 0.0
      %572 = vmatprep.subr.mxu0 0.0
      %573 = vmatpush1.msra.mxu0 0.0
      %574 = vmatprep.subr.mxu0 0.0
      %575 = vmatpush1.msra.mxu0 0.0
      %576 = vmatprep.subr.mxu0 0.0
      %577 = vmatpush1.msra.mxu0 0.0
      %578 = vmatprep.subr.mxu0 0.0
      %579 = vmatpush1.msra.mxu0 0.0
      %580 = vmatprep.subr.mxu0 0.0
      %581 = vmatpush1.msra.mxu0 0.0
      %582 = vmatprep.subr.mxu0 0.0
      %583 = vmatpush1.msra.mxu0 0.0
      %584 = vmatprep.mubr.f32.mxu0 0.0
      %585 = vmatmul.mubr.f32.gmra.mrb[0].mxu0 %v408
      %v586 = vpop.f32.mrb[0].mxu0
      %v587 = vadd.f32 %v512, %v586
      %v588 = vpop.f32.mrb[0].mxu0
      %589 = vmatprep.mubr.f32.mxu0 0.0
      %590 = vmatmul.mubr.f32.gmra.mrb[0].mxu0 %v409
      %v591 = vpop.f32.mrb[0].mxu0
      %v592 = vadd.f32 %v517, %v591
      %v593 = vpop.f32.mrb[0].mxu0
      %594 = vdwg.mxu0
      %v595 = vld [vmem:[%s345 + $0x2] sm:$0xff]
      %v596 = vld [vmem:[%s345 + $0xa] sm:$0xff]
      %s597 = scalar_lea.vmem %s1, 256
      %v598 = vld [vmem:[%s597] sm:$0xff]
      %v599 = vld [vmem:[%s597 + $0x8] sm:$0xff]
      %v600 = vld [vmem:[%s597 + $0x10] sm:$0xff]
      %v601 = vld [vmem:[%s597 + $0x18] sm:$0xff]
      %v602 = vld [vmem:[%s597 + $0x20] sm:$0xff]
      %v603 = vld [vmem:[%s597 + $0x28] sm:$0xff]
      %v604 = vld [vmem:[%s597 + $0x30] sm:$0xff]
      %v605 = vld [vmem:[%s597 + $0x38] sm:$0xff]
      %v606 = vld [vmem:[%s597 + $0x40] sm:$0xff]
      %v607 = vld [vmem:[%s597 + $0x48] sm:$0xff]
      %v608 = vld [vmem:[%s597 + $0x50] sm:$0xff]
      %v609 = vld [vmem:[%s597 + $0x58] sm:$0xff]
      %v610 = vld [vmem:[%s597 + $0x60] sm:$0xff]
      %v611 = vld [vmem:[%s597 + $0x68] sm:$0xff]
      %v612 = vld [vmem:[%s597 + $0x70] sm:$0xff]
      %v613 = vld [vmem:[%s597 + $0x78] sm:$0xff]
      %614 = vmatprep.subr.mxu0 0.0
      %615 = vmatpush1.msra.mxu0 %v598
      %616 = vmatprep.subr.mxu0 0.0
      %617 = vmatpush1.msra.mxu0 %v599
      %618 = vmatprep.subr.mxu0 0.0
      %619 = vmatpush1.msra.mxu0 %v600
      %620 = vmatprep.subr.mxu0 0.0
      %621 = vmatpush1.msra.mxu0 %v601
      %622 = vmatprep.subr.mxu0 0.0
      %623 = vmatpush1.msra.mxu0 %v602
      %624 = vmatprep.subr.mxu0 0.0
      %625 = vmatpush1.msra.mxu0 %v603
      %626 = vmatprep.subr.mxu0 0.0
      %627 = vmatpush1.msra.mxu0 %v604
      %628 = vmatprep.subr.mxu0 0.0
      %629 = vmatpush1.msra.mxu0 %v605
      %630 = vmatprep.subr.mxu0 0.0
      %631 = vmatpush1.msra.mxu0 %v606
      %632 = vmatprep.subr.mxu0 0.0
      %633 = vmatpush1.msra.mxu0 %v607
      %634 = vmatprep.subr.mxu0 0.0
      %635 = vmatpush1.msra.mxu0 %v608
      %636 = vmatprep.subr.mxu0 0.0
      %637 = vmatpush1.msra.mxu0 %v609
      %638 = vmatprep.subr.mxu0 0.0
      %639 = vmatpush1.msra.mxu0 %v610
      %640 = vmatprep.subr.mxu0 0.0
      %641 = vmatpush1.msra.mxu0 %v611
      %642 = vmatprep.subr.mxu0 0.0
      %643 = vmatpush1.msra.mxu0 %v612
      %644 = vmatprep.subr.mxu0 0.0
      %645 = vmatpush1.msra.mxu0 %v613
      %646 = vmatprep.subr.mxu0 0.0
      %647 = vmatpush1.msra.mxu0 0.0
      %648 = vmatprep.subr.mxu0 0.0
      %649 = vmatpush1.msra.mxu0 0.0
      %650 = vmatprep.subr.mxu0 0.0
      %651 = vmatpush1.msra.mxu0 0.0
      %652 = vmatprep.subr.mxu0 0.0
      %653 = vmatpush1.msra.mxu0 0.0
      %654 = vmatprep.subr.mxu0 0.0
      %655 = vmatpush1.msra.mxu0 0.0
      %656 = vmatprep.subr.mxu0 0.0
      %657 = vmatpush1.msra.mxu0 0.0
      %658 = vmatprep.subr.mxu0 0.0
      %659 = vmatpush1.msra.mxu0 0.0
      %660 = vmatprep.subr.mxu0 0.0
      %661 = vmatpush1.msra.mxu0 0.0
      %662 = vmatprep.subr.mxu0 0.0
      %663 = vmatpush1.msra.mxu0 0.0
      %664 = vmatprep.subr.mxu0 0.0
      %665 = vmatpush1.msra.mxu0 0.0
      %666 = vmatprep.subr.mxu0 0.0
      %667 = vmatpush1.msra.mxu0 0.0
      %668 = vmatprep.subr.mxu0 0.0
      %669 = vmatpush1.msra.mxu0 0.0
      %670 = vmatprep.subr.mxu0 0.0
      %671 = vmatpush1.msra.mxu0 0.0
      %672 = vmatprep.subr.mxu0 0.0
      %673 = vmatpush1.msra.mxu0 0.0
      %674 = vmatprep.subr.mxu0 0.0
      %675 = vmatpush1.msra.mxu0 0.0
      %676 = vmatprep.subr.mxu0 0.0
      %677 = vmatpush1.msra.mxu0 0.0
      %678 = vmatprep.mubr.f32.mxu0 0.0
      %679 = vmatmul.mubr.f32.gmra.mrb[0].mxu0 %v595
      %v680 = vpop.f32.mrb[0].mxu0
      %v681 = vadd.f32 0.0, %v680
      %v682 = vpop.f32.mrb[0].mxu0
      %683 = vmatprep.mubr.f32.mxu0 0.0
      %684 = vmatmul.mubr.f32.gmra.mrb[0].mxu0 %v596
      %v685 = vpop.f32.mrb[0].mxu0
      %v686 = vadd.f32 0.0, %v685
      %v687 = vpop.f32.mrb[0].mxu0
      %688 = vdwg.mxu0
      %v689 = vadd.f32 %v587, %v681
      %v690 = vadd.f32 %v592, %v686
      %v691 = vld [vmem:[%s2] sm:$0xff]
      %v692 = vld [vmem:[%s2 + $0x8] sm:$0xff]
      %v693 = vld [vmem:[%s2 + $0x10] sm:$0xff]
      %v694 = vld [vmem:[%s2 + $0x18] sm:$0xff]
      %v695 = vld [vmem:[%s2 + $0x20] sm:$0xff]
      %v696 = vld [vmem:[%s2 + $0x28] sm:$0xff]
      %v697 = vld [vmem:[%s2 + $0x30] sm:$0xff]
      %v698 = vld [vmem:[%s2 + $0x38] sm:$0xff]
      %v699 = vld [vmem:[%s2 + $0x40] sm:$0xff]
      %v700 = vld [vmem:[%s2 + $0x48] sm:$0xff]
      %v701 = vld [vmem:[%s2 + $0x50] sm:$0xff]
      %v702 = vld [vmem:[%s2 + $0x58] sm:$0xff]
      %v703 = vld [vmem:[%s2 + $0x60] sm:$0xff]
      %v704 = vld [vmem:[%s2 + $0x68] sm:$0xff]
      %v705 = vld [vmem:[%s2 + $0x70] sm:$0xff]
      %v706 = vld [vmem:[%s2 + $0x78] sm:$0xff]
      %v707 = vld [vmem:[%s3] sm:$0x1]
      %v709 = vlaneseq
      %v710 = vshrl.u32 %v709, 7
      %v711 = vsub.s32 0, %v710
      %v712 = vrot.slane %v707, %v711
      %714 = vmatprep.subr.mxu0 0.0
      %715 = vmatpush1.msra.mxu0 %v691
      %716 = vmatprep.subr.mxu0 0.0
      %717 = vmatpush1.msra.mxu0 %v692
      %718 = vmatprep.subr.mxu0 0.0
      %719 = vmatpush1.msra.mxu0 %v693
      %720 = vmatprep.subr.mxu0 0.0
      %721 = vmatpush1.msra.mxu0 %v694
      %722 = vmatprep.subr.mxu0 0.0
      %723 = vmatpush1.msra.mxu0 %v695
      %724 = vmatprep.subr.mxu0 0.0
      %725 = vmatpush1.msra.mxu0 %v696
      %726 = vmatprep.subr.mxu0 0.0
      %727 = vmatpush1.msra.mxu0 %v697
      %728 = vmatprep.subr.mxu0 0.0
      %729 = vmatpush1.msra.mxu0 %v698
      %730 = vmatprep.subr.mxu0 0.0
      %731 = vmatpush1.msra.mxu0 %v699
      %732 = vmatprep.subr.mxu0 0.0
      %733 = vmatpush1.msra.mxu0 %v700
      %734 = vmatprep.subr.mxu0 0.0
      %735 = vmatpush1.msra.mxu0 %v701
      %736 = vmatprep.subr.mxu0 0.0
      %737 = vmatpush1.msra.mxu0 %v702
      %738 = vmatprep.subr.mxu0 0.0
      %739 = vmatpush1.msra.mxu0 %v703
      %740 = vmatprep.subr.mxu0 0.0
      %741 = vmatpush1.msra.mxu0 %v704
      %742 = vmatprep.subr.mxu0 0.0
      %743 = vmatpush1.msra.mxu0 %v705
      %744 = vmatprep.subr.mxu0 0.0
      %745 = vmatpush1.msra.mxu0 %v706
      %746 = vmatprep.subr.mxu0 0.0
      %747 = vmatpush1.msra.mxu0 0.0
      %748 = vmatprep.subr.mxu0 0.0
      %749 = vmatpush1.msra.mxu0 0.0
      %750 = vmatprep.subr.mxu0 0.0
      %751 = vmatpush1.msra.mxu0 0.0
      %752 = vmatprep.subr.mxu0 0.0
      %753 = vmatpush1.msra.mxu0 0.0
      %754 = vmatprep.subr.mxu0 0.0
      %755 = vmatpush1.msra.mxu0 0.0
      %756 = vmatprep.subr.mxu0 0.0
      %757 = vmatpush1.msra.mxu0 0.0
      %758 = vmatprep.subr.mxu0 0.0
      %759 = vmatpush1.msra.mxu0 0.0
      %760 = vmatprep.subr.mxu0 0.0
      %761 = vmatpush1.msra.mxu0 0.0
      %762 = vmatprep.subr.mxu0 0.0
      %763 = vmatpush1.msra.mxu0 0.0
      %764 = vmatprep.subr.mxu0 0.0
      %765 = vmatpush1.msra.mxu0 0.0
      %766 = vmatprep.subr.mxu0 0.0
      %767 = vmatpush1.msra.mxu0 0.0
      %768 = vmatprep.subr.mxu0 0.0
      %769 = vmatpush1.msra.mxu0 0.0
      %770 = vmatprep.subr.mxu0 0.0
      %771 = vmatpush1.msra.mxu0 0.0
      %772 = vmatprep.subr.mxu0 0.0
      %773 = vmatpush1.msra.mxu0 0.0
      %774 = vmatprep.subr.mxu0 0.0
      %775 = vmatpush1.msra.mxu0 0.0
      %776 = vmatprep.subr.mxu0 0.0
      %777 = vmatpush1.msra.mxu0 0.0
      %778 = vmatprep.mubr.f32.mxu0 0.0
      %779 = vmatmul.mubr.f32.gmra.mrb[0].mxu0 %v689
      %v780 = vpop.f32.mrb[0].mxu0
      %v781 = vadd.f32 %v712, %v780
      %v782 = vpop.f32.mrb[0].mxu0
      %783 = vmatprep.mubr.f32.mxu0 0.0
      %784 = vmatmul.mubr.f32.gmra.mrb[0].mxu0 %v690
      %v785 = vpop.f32.mrb[0].mxu0
      %v786 = vadd.f32 %v712, %v785
      %v787 = vpop.f32.mrb[0].mxu0
      %788 = vdwg.mxu0
      %v789 = vmax.f32 %v781, 0.0
      %v790 = vmax.f32 %v786, 0.0
      %791 = vst [vmem:[%s251] sm:$0xff] %v789
      %792 = vst [vmem:[%s251 + $0x8] sm:$0xff] %v790
      %v793 = vld [vmem:[%s345 + $0x1] sm:$0xff]
      %v794 = vld [vmem:[%s345 + $0x9] sm:$0xff]
      %795 = vst [vmem:[%s261] sm:$0xff] %v793
      %796 = vst [vmem:[%s261 + $0x8] sm:$0xff] %v794
      %v797 = vlaneseq
      %v798 = vshrl.u32 %v797, 7
      %v799 = vadd.s32 %v798, 8
      %v800 = vstv %s343
      %v801 = vadd.s32 %v800, %v798
      %v802 = vadd.s32 %v800, %v799
      %vm803 = vcmp.lt.s32.totalorder %v801, 65
      %vm804 = vcmp.lt.s32.totalorder %v802, 65
      %v805 = vsel %vm803, 1, 0
      %v806 = vsel %vm804, 1, 0
      %vm807 = vcmp.eq.s32.totalorder %v805, 1
      %vm808 = vcmp.eq.s32.totalorder %v806, 1
      %v809 = vsel %vm807, %v789, 0.0
      %v810 = vsel %vm808, %v790, 0.0
      %v811 = vadd.f32 %v809, %v810
      %v812 = vrot.slane %v811, 4
      %v813 = vadd.f32 %v811, %v812
      %v814 = vrot.slane %v813, 2
      %v815 = vadd.f32 %v813, %v814
      %v816 = vrot.slane %v815, 1
      %v817 = vadd.f32 %v815, %v816
      %v818 = vmul.f32 %v809, %v809
      %v819 = vmul.f32 %v810, %v810
      %v820 = vadd.f32 %v818, %v819
      %v821 = vrot.slane %v820, 4
      %v822 = vadd.f32 %v820, %v821
      %v823 = vrot.slane %v822, 2
      %v824 = vadd.f32 %v822, %v823
      %v825 = vrot.slane %v824, 1
      %v826 = vadd.f32 %v824, %v825
      %vm827 = vcmp.eq.s32.totalorder %v798, 0
      %vm828 = vcmp.eq.s32.totalorder %v798, 1
      %v829 = vsel %vm828, %v826, 0.0
      %v830 = vsel %vm827, %v817, %v829
      %831 = vst [vmem:[%s270] sm:$0xff] %v830
      %s832 = smul.u32 %s22, 5
      %s833 = sadd.s32 %s832, %s23
      %s834 = smul.u32 2, %s833
      %p835 = scmp.lt.s32.totalorder %s834, 19
      %s836 = scalar_select %p835, %s834, 19
      %s837 = smul.addr %s836, 8
      %s838 = scalar_lea.vmem %s4, %s837
      %s839 = smul.u32 %s22, 5
      %s840 = sadd.s32 %s839, %s23
      %s841 = smul.u32 2, %s840
      %p842 = scmp.lt.s32.totalorder %s841, 19
      %s843 = scalar_select %p842, %s841, 19
      %s844 = smul.addr %s843, 8
      %s845 = scalar_lea.vmem %s5, %s844
      %s846 = smul.u32 %s22, 5
      %s847 = sadd.s32 %s846, %s23
      %p848 = scmp.lt.s32.totalorder %s847, 9
      %s849 = scalar_select %p848, %s847, 9
      %s850 = smul.addr %s849, 8
      %s851 = scalar_lea.vmem %s6, %s850
      // Predicated region
      $region109: #{factorized_tdnn_forward.2} parent=31 // pred_check
        %p852 = pneg %p115
      $region110: #{factorized_tdnn_forward.2} parent=31 // pred_check_branch
        %854 = sbr.rel (%p852) target = $region112
      $region111: #{factorized_tdnn_forward.2} parent=31 // pred_region
        %s855 = smul.u32 %s22, 5
        %s856 = sadd.s32 %s855, %s23
        %s857 = smul.u32 2, %s856
      $region112: #{factorized_tdnn_forward.2} parent=31 // pred_fallthru
        _
      // Predicated region
      $region113: #{factorized_tdnn_forward.2} parent=31 // pred_check
        %p858 = pneg %p145
      $region114: #{factorized_tdnn_forward.2} parent=31 // pred_check_branch
        %860 = sbr.rel (%p858) target = $region116
      $region115: #{factorized_tdnn_forward.2} parent=31 // pred_region
        %s861 = smul.u32 %s22, 5
        %s862 = sadd.s32 %s861, %s23
        %s863 = smul.u32 2, %s862
      $region116: #{factorized_tdnn_forward.2} parent=31 // pred_fallthru
        _
      // Predicated region
      $region117: #{factorized_tdnn_forward.2} parent=31 // pred_check
        %p864 = pneg %p175
      $region118: #{factorized_tdnn_forward.2} parent=31 // pred_check_branch
        %866 = sbr.rel (%p864) target = $region120
      $region119: #{factorized_tdnn_forward.2} parent=31 // pred_region
        %s867 = smul.u32 %s22, 5
        %s868 = sadd.s32 %s867, %s23
      $region120: #{factorized_tdnn_forward.2} parent=31 // pred_fallthru
        _
    $region32: #{factorized_tdnn_forward.2} parent=5 // pred_fallthru
      _
    %p869 = scmp.le.s32.totalorder 2, %s13
    // Predicated region
    $region121: #{factorized_tdnn_forward.2} parent=5 // pred_check
      %p870 = pneg %p869
    $region122: #{factorized_tdnn_forward.2} parent=5 // pred_check_branch
      %872 = sbr.rel (%p870) target = $region124
    $region123: #{factorized_tdnn_forward.2} parent=5 // pred_region
      %s873 = ssub.s32 %s13, 2
      // Predicated region
      $region125: #{factorized_tdnn_forward.2} parent=123 // pred_check
        %p874 = pneg %p121
      $region126: #{factorized_tdnn_forward.2} parent=123 // pred_check_branch
        %876 = sbr.rel (%p874) target = $region128
      $region127: #{factorized_tdnn_forward.2} parent=123 // pred_region
        %s877 = smul.u32 %s24, 5
        %s878 = sadd.s32 %s877, %s25
        %s879 = smul.u32 2, %s878
        %p880 = scmp.lt.s32.totalorder %s879, 19
        %s881 = scalar_select %p880, %s879, 19
        %s882 = smul.addr %s881, 8
        %s883 = scalar_lea.vmem %s4, %s882
      $region128: #{factorized_tdnn_forward.2} parent=123 // pred_fallthru
        _
      // Predicated region
      $region129: #{factorized_tdnn_forward.2} parent=123 // pred_check
        %p884 = pneg %p151
      $region130: #{factorized_tdnn_forward.2} parent=123 // pred_check_branch
        %886 = sbr.rel (%p884) target = $region132
      $region131: #{factorized_tdnn_forward.2} parent=123 // pred_region
        %s887 = smul.u32 %s24, 5
        %s888 = sadd.s32 %s887, %s25
        %s889 = smul.u32 2, %s888
        %p890 = scmp.lt.s32.totalorder %s889, 19
        %s891 = scalar_select %p890, %s889, 19
        %s892 = smul.addr %s891, 8
        %s893 = scalar_lea.vmem %s5, %s892
      $region132: #{factorized_tdnn_forward.2} parent=123 // pred_fallthru
        _
      // Predicated region
      $region133: #{factorized_tdnn_forward.2} parent=123 // pred_check
        %p894 = pneg %p181
      $region134: #{factorized_tdnn_forward.2} parent=123 // pred_check_branch
        %896 = sbr.rel (%p894) target = $region136
      $region135: #{factorized_tdnn_forward.2} parent=123 // pred_region
        %s897 = smul.u32 %s24, 5
        %s898 = sadd.s32 %s897, %s25
        %p899 = scmp.lt.s32.totalorder %s898, 9
        %s900 = scalar_select %p899, %s898, 9
        %s901 = smul.addr %s900, 8
        %s902 = scalar_lea.vmem %s6, %s901
      $region136: #{factorized_tdnn_forward.2} parent=123 // pred_fallthru
        _
    $region124: #{factorized_tdnn_forward.2} parent=5 // pred_fallthru
      _
  $region6: #{factorized_tdnn_forward.2} parent=0 // loop_footer
    %s17 = sadd.s32 1, %s13
  $region7: #{factorized_tdnn_forward.2} parent=0 // loop_footer_branch
    %12 = sbr.rel target = $region3
  $region8: #{factorized_tdnn_forward.2} parent=0 // loop_exit
    _
  %903 = vsyncmov [#allocation3]
  %s904 = vpop.sfrf %903
  %p905 = scmp.eq.s32.totalorder %s904, 0
  %p906 = pneg %p905
  %908 = shalt.err (%p906)
  %s909 = scalar_lea.sflag [#allocation3], 1
  %910 = vsyncmov %s909
  %s911 = vpop.sfrf %910
  %p912 = scmp.eq.s32.totalorder %s911, 0
  %p913 = pneg %p912
  %915 = shalt.err (%p913)

</llo_original>
